<compile_context>
chip_gen: v6e
topology: v6e:2x2x1
jax: 0.10.0
libtpu: 0.0.40
codegen_flags: <defaults>
</compile_context>

<pallas_src>
import functools

import jax
import jax.numpy as jnp
from jax.experimental import pallas as pl
from jax.experimental.pallas import tpu as pltpu

IN_DIM = 128      # Linear(128, 512)
HID = 512
CODE_DIM = 32     # Linear(512, 32)
NUM_CODES = 128   # codebook (128, 32)
BETA = 0.25

# MXU operand dtype (accumulation is always f32 via preferred_element_type).
MATMUL_DTYPE = jnp.bfloat16


def _round_up(n, m):
    return ((n + m - 1) // m) * m


def _vqvae_kernel(x_ref, w1_ref, b1_ref, w2_ref, b2_ref,
                  cbt_ref, csq_ref, cbpad_ref, cbw3_ref, w4_ref, b4_ref,
                  zhat_ref, zqpad_ref, loss_ref, *, batch, tb):
    x = x_ref[...]                                                   # [TB, 128] f32

    # ---- encoder: Linear(128,512) + ReLU + Linear(512,32) ----
    h1 = jnp.dot(x.astype(MATMUL_DTYPE), w1_ref[...],
                 preferred_element_type=jnp.float32) + b1_ref[...]
    h1 = jnp.maximum(h1, 0.0)                                        # [TB, 512]
    z = jnp.dot(h1.astype(MATMUL_DTYPE), w2_ref[...],
                preferred_element_type=jnp.float32) + b2_ref[...]    # [TB, 32]

    # ---- vector quantizer (kept in f32) ----
    # squared euclidean distance ||z||^2 + ||c||^2 - 2 z.c  (argmin-equivalent
    # to torch.cdist's euclidean distance). ||c||^2 and c^T precomputed on host.
    z_sq = jnp.sum(z * z, axis=1, keepdims=True)                     # [TB, 1]
    cross = jnp.dot(z, cbt_ref[...],
                    preferred_element_type=jnp.float32)              # [TB, 128]
    dist2 = z_sq + csq_ref[...] - 2.0 * cross                        # [TB, 128]

    # argmin with first-index tie-break (matches torch.argmin).
    iota = jax.lax.broadcasted_iota(jnp.int32, dist2.shape, 1)       # [TB, 128]
    minval = jnp.min(dist2, axis=1, keepdims=True)                   # [TB, 1]
    indices = jnp.min(jnp.where(dist2 <= minval, iota, NUM_CODES),
                      axis=1, keepdims=True)                         # [TB, 1]
    onehot = (iota == indices).astype(jnp.float32)                   # [TB, 128]

    # gather codebook rows, lane-dense: codebook zero-padded to 128 columns.
    zq_pad = jnp.dot(onehot, cbpad_ref[...],
                     preferred_element_type=jnp.float32)             # [TB, 128]
    zqpad_ref[...] = zq_pad
    z_q = zq_pad[:, :CODE_DIM]                                       # [TB, 32]

    # ---- decoder: Linear(32,512) + ReLU + Linear(512,128) ----
    # straight-through forward value is z_q; codebook gather folded into the
    # first decoder layer: onehot @ (cb @ w3 + b3) == z_q @ w3 + b3.
    h2 = jnp.dot(onehot.astype(MATMUL_DTYPE), cbw3_ref[...],
                 preferred_element_type=jnp.float32)
    h2 = jnp.maximum(h2, 0.0)                                        # [TB, 512]
    z_hat = jnp.dot(h2.astype(MATMUL_DTYPE), w4_ref[...],
                    preferred_element_type=jnp.float32) + b4_ref[...]
    zhat_ref[...] = z_hat                                            # [TB, 128]

    # ---- per-block loss partial sums (grid-safe, padded rows masked) ----
    row = pl.program_id(0) * tb + jax.lax.broadcasted_iota(
        jnp.int32, (tb, 1), 0)
    valid = (row < batch).astype(jnp.float32)                        # [TB, 1]
    rec_part = jnp.sum(valid * (z_hat - x) ** 2)
    vq_part = jnp.sum(valid * (z_q - z) ** 2)

    lane = jax.lax.broadcasted_iota(jnp.int32, (8, 128), 1)
    sub = jax.lax.broadcasted_iota(jnp.int32, (8, 128), 0)
    first = sub == 0
    loss_ref[...] = jnp.where(first & (lane == 0), rec_part,
                              jnp.where(first & (lane == 1), vq_part, 0.0))


def vqvae_forward(x, params, *, tb=512):
    """x: [B, 128] f32. Returns (z_hat [B,128], z_q [B,32], total_loss scalar)."""
    B = x.shape[0]
    w1, b1, w2, b2, cb, w3, b3, w4, b4 = params

    # Host-side precompute (constant-folded / fused by XLA).
    cb_t = cb.T                                                      # [32, 128]
    c_sq = jnp.sum(cb * cb, axis=1)[None, :]                         # [1, 128]
    cb_pad = jnp.pad(cb, ((0, 0), (0, NUM_CODES - CODE_DIM)))        # [128, 128]
    cb_w3 = jnp.dot(cb, w3) + b3                                     # [128, 512]

    w1m = w1.astype(MATMUL_DTYPE)
    w2m = w2.astype(MATMUL_DTYPE)
    cb_w3m = cb_w3.astype(MATMUL_DTYPE)
    w4m = w4.astype(MATMUL_DTYPE)

    # Batch tiling: TB multiple of 8 (>=256 recommended on v6e/v7x).
    TB = min(tb, _round_up(B, 8))
    B_pad = _round_up(B, TB)
    nblk = B_pad // TB
    if B_pad != B:
        x = jnp.pad(x, ((0, B_pad - B), (0, 0)))

    const = lambda shape: pl.BlockSpec(shape, lambda i: (0, 0))
    batched = lambda shape: pl.BlockSpec(shape, lambda i: (i, 0))

    z_hat, zq_pad, loss_parts = pl.pallas_call(
        functools.partial(_vqvae_kernel, batch=B, tb=TB),
        grid=(nblk,),
        out_shape=(
            jax.ShapeDtypeStruct((B_pad, IN_DIM), jnp.float32),      # z_hat
            jax.ShapeDtypeStruct((B_pad, NUM_CODES), jnp.float32),   # z_q (padded)
            jax.ShapeDtypeStruct((nblk * 8, 128), jnp.float32),      # loss partials
        ),
        in_specs=[
            batched((TB, IN_DIM)),           # x           (pipelined per block)
            const((IN_DIM, HID)),            # w1          (resident)
            const((1, HID)),                 # b1
            const((HID, CODE_DIM)),          # w2
            const((1, CODE_DIM)),            # b2
            const((CODE_DIM, NUM_CODES)),    # codebook^T
            const((1, NUM_CODES)),           # ||codebook||^2
            const((NUM_CODES, NUM_CODES)),   # codebook padded to 128 cols
            const((NUM_CODES, HID)),         # cb @ w3 + b3
            const((HID, IN_DIM)),            # w4
            const((1, IN_DIM)),              # b4
        ],
        out_specs=(
            batched((TB, IN_DIM)),
            batched((TB, NUM_CODES)),
            pl.BlockSpec((8, 128), lambda i: (i, 0)),
        ),
        compiler_params=pltpu.CompilerParams(
            dimension_semantics=("parallel",)),
    )(x, w1m, b1, w2m, b2, cb_t, c_sq, cb_pad, cb_w3m, w4m, b4)

    z_hat = z_hat[:B]
    z_q = zq_pad[:B, :CODE_DIM]
    rec_loss = jnp.sum(loss_parts[:, 0]) / (B * IN_DIM)
    mse_zq = jnp.sum(loss_parts[:, 1]) / (B * CODE_DIM)
    # codebook_loss + beta * commitment_loss; both forward values == mse(z_q, z)
    total_loss = rec_loss + (1.0 + BETA) * mse_zq
    # TODO(synk): straight-through / detach semantics are gradient-only; a
    # custom_vjp would be needed if this kernel is ever differentiated.
    return z_hat, z_q, total_loss


def init_params(key):
    """Deterministic synthetic parameters (shapes from VQVAE.__init__)."""
    ks = jax.random.split(key, 5)

    def lin(k, fan_in, fan_out):
        w = jax.random.normal(k, (fan_in, fan_out), jnp.float32) / jnp.sqrt(
            jnp.float32(fan_in))
        b = jnp.zeros((1, fan_out), jnp.float32)
        return w, b

    w1, b1 = lin(ks[0], IN_DIM, HID)        # encoder Linear(128, 512)
    w2, b2 = lin(ks[1], HID, CODE_DIM)      # encoder Linear(512, 32)
    cb = jax.random.normal(ks[2], (NUM_CODES, CODE_DIM), jnp.float32)
    w3, b3 = lin(ks[3], CODE_DIM, HID)      # decoder Linear(32, 512)
    w4, b4 = lin(ks[4], HID, IN_DIM)        # decoder Linear(512, 128)
    return (w1, b1, w2, b2, cb, w3, b3, w4, b4)


if __name__ == "__main__":
    key = jax.random.PRNGKey(0)
    kx, kp = jax.random.split(key)

    # NOTE: tiny batches leave the MXU mostly idle; stack requests to >=256
    # rows before calling vqvae_forward for real workloads.
    B = 8
    x = jax.random.normal(kx, (B, IN_DIM), jnp.float32)
    params = init_params(kp)

    z_hat, z_q, total_loss = vqvae_forward(x, params)
    jax.block_until_ready((z_hat, z_q, total_loss))

    assert z_hat.shape == (B, IN_DIM)
    assert z_q.shape == (B, CODE_DIM)
    assert total_loss.shape == ()
    assert bool(jnp.isfinite(total_loss))
    print("KERNEL_OK")
</pallas_src>

<mosaic_0001>
module attributes {stable_mosaic.version = 11 : i64} {
  func.func @_vqvae_kernel(%arg0: i32, %arg1: memref<8x128xf32, #tpu.memory_space<vmem>>, %arg2: memref<128x512xbf16, #tpu.memory_space<vmem>>, %arg3: memref<1x512xf32, #tpu.memory_space<vmem>>, %arg4: memref<512x32xbf16, #tpu.memory_space<vmem>>, %arg5: memref<1x32xf32, #tpu.memory_space<vmem>>, %arg6: memref<32x128xf32, #tpu.memory_space<vmem>>, %arg7: memref<1x128xf32, #tpu.memory_space<vmem>>, %arg8: memref<128x128xf32, #tpu.memory_space<vmem>>, %arg9: memref<128x512xbf16, #tpu.memory_space<vmem>>, %arg10: memref<512x128xbf16, #tpu.memory_space<vmem>>, %arg11: memref<1x128xf32, #tpu.memory_space<vmem>>, %arg12: memref<8x128xf32, #tpu.memory_space<vmem>>, %arg13: memref<8x128xf32, #tpu.memory_space<vmem>>, %arg14: memref<8x128xf32, #tpu.memory_space<vmem>>) attributes {dimension_semantics = [#tpu.dimension_semantics<parallel>], iteration_bounds = array<i64: 1>, scalar_prefetch = 0 : i64, scratch_operands = 0 : i64, tpu.core_type = #tpu.core_type<tc>, window_params = [{transform_indices = @transform_0, window_bounds = array<i64: 8, 128>}, {pipeline_mode = #tpu.pipeline_mode<synchronous>, transform_indices = @transform_1, window_bounds = array<i64: 128, 512>}, {pipeline_mode = #tpu.pipeline_mode<synchronous>, transform_indices = @transform_2, window_bounds = array<i64: 1, 512>}, {pipeline_mode = #tpu.pipeline_mode<synchronous>, transform_indices = @transform_3, window_bounds = array<i64: 512, 32>}, {pipeline_mode = #tpu.pipeline_mode<synchronous>, transform_indices = @transform_4, window_bounds = array<i64: 1, 32>}, {pipeline_mode = #tpu.pipeline_mode<synchronous>, transform_indices = @transform_5, window_bounds = array<i64: 32, 128>}, {pipeline_mode = #tpu.pipeline_mode<synchronous>, transform_indices = @transform_6, window_bounds = array<i64: 1, 128>}, {pipeline_mode = #tpu.pipeline_mode<synchronous>, transform_indices = @transform_7, window_bounds = array<i64: 128, 128>}, {pipeline_mode = #tpu.pipeline_mode<synchronous>, transform_indices = @transform_8, window_bounds = array<i64: 128, 512>}, {pipeline_mode = #tpu.pipeline_mode<synchronous>, transform_indices = @transform_9, window_bounds = array<i64: 512, 128>}, {pipeline_mode = #tpu.pipeline_mode<synchronous>, transform_indices = @transform_10, window_bounds = array<i64: 1, 128>}, {transform_indices = @transform_11, window_bounds = array<i64: 8, 128>}, {transform_indices = @transform_12, window_bounds = array<i64: 8, 128>}, {transform_indices = @transform_13, window_bounds = array<i64: 8, 128>}]} {
    %c0 = arith.constant 0 : index
    %c0_0 = arith.constant 0 : index
    %0 = vector.load %arg1[%c0, %c0_0] : memref<8x128xf32, #tpu.memory_space<vmem>>, vector<8x128xf32>
    %1 = arith.truncf %0 : vector<8x128xf32> to vector<8x128xbf16>
    %c0_1 = arith.constant 0 : index
    %c0_2 = arith.constant 0 : index
    %2 = vector.load %arg2[%c0_1, %c0_2] : memref<128x512xbf16, #tpu.memory_space<vmem>>, vector<128x512xbf16>
    %cst = arith.constant dense<0.000000e+00> : vector<8x512xf32>
    %3 = tpu.matmul %1, %2, %cst {dimension_numbers = #tpu.dot_dimension_numbers<[1], [0], [0], [1], [0, 0, 1, 1], [], []>} : vector<8x128xbf16>, vector<128x512xbf16>, vector<8x512xf32> -> vector<8x512xf32>
    %c0_3 = arith.constant 0 : index
    %c0_4 = arith.constant 0 : index
    %4 = vector.load %arg3[%c0_3, %c0_4] : memref<1x512xf32, #tpu.memory_space<vmem>>, vector<1x512xf32>
    %5 = vector.broadcast %4 : vector<1x512xf32> to vector<8x512xf32>
    %6 = arith.addf %3, %5 : vector<8x512xf32>
    %cst_5 = arith.constant 0.000000e+00 : f32
    %7 = vector.broadcast %cst_5 : f32 to vector<8x512xf32>
    %8 = arith.maximumf %6, %7 : vector<8x512xf32>
    %9 = arith.truncf %8 : vector<8x512xf32> to vector<8x512xbf16>
    %c0_6 = arith.constant 0 : index
    %c0_7 = arith.constant 0 : index
    %10 = vector.load %arg4[%c0_6, %c0_7] : memref<512x32xbf16, #tpu.memory_space<vmem>>, vector<512x32xbf16>
    %cst_8 = arith.constant dense<0.000000e+00> : vector<8x32xf32>
    %11 = tpu.matmul %9, %10, %cst_8 {dimension_numbers = #tpu.dot_dimension_numbers<[1], [0], [0], [1], [0, 0, 1, 1], [], []>} : vector<8x512xbf16>, vector<512x32xbf16>, vector<8x32xf32> -> vector<8x32xf32>
    %c0_9 = arith.constant 0 : index
    %c0_10 = arith.constant 0 : index
    %12 = vector.load %arg5[%c0_9, %c0_10] : memref<1x32xf32, #tpu.memory_space<vmem>>, vector<1x32xf32>
    %13 = vector.broadcast %12 : vector<1x32xf32> to vector<8x32xf32>
    %14 = arith.addf %11, %13 : vector<8x32xf32>
    %15 = arith.mulf %14, %14 : vector<8x32xf32>
    %cst_11 = arith.constant dense<0.000000e+00> : vector<8xf32>
    %16 = vector.multi_reduction <add>, %15, %cst_11 [1] : vector<8x32xf32> to vector<8xf32>
    %17 = vector.shape_cast %16 : vector<8xf32> to vector<8x1xf32>
    %c0_12 = arith.constant 0 : index
    %c0_13 = arith.constant 0 : index
    %18 = vector.load %arg6[%c0_12, %c0_13] : memref<32x128xf32, #tpu.memory_space<vmem>>, vector<32x128xf32>
    %cst_14 = arith.constant dense<0.000000e+00> : vector<8x128xf32>
    %19 = tpu.matmul %14, %18, %cst_14 {dimension_numbers = #tpu.dot_dimension_numbers<[1], [0], [0], [1], [0, 0, 1, 1], [], []>} : vector<8x32xf32>, vector<32x128xf32>, vector<8x128xf32> -> vector<8x128xf32>
    %c0_15 = arith.constant 0 : index
    %c0_16 = arith.constant 0 : index
    %20 = vector.load %arg7[%c0_15, %c0_16] : memref<1x128xf32, #tpu.memory_space<vmem>>, vector<1x128xf32>
    %21 = vector.broadcast %17 : vector<8x1xf32> to vector<8x128xf32>
    %22 = vector.broadcast %20 : vector<1x128xf32> to vector<8x128xf32>
    %23 = arith.addf %21, %22 : vector<8x128xf32>
    %cst_17 = arith.constant 2.000000e+00 : f32
    %24 = vector.broadcast %cst_17 : f32 to vector<8x128xf32>
    %25 = arith.mulf %24, %19 : vector<8x128xf32>
    %26 = arith.subf %23, %25 : vector<8x128xf32>
    %27 = tpu.iota {dimensions = array<i32: 1>} : vector<8x128xi32>
    %cst_18 = arith.constant dense<0x7F800000> : vector<8xf32>
    %28 = vector.multi_reduction <minimumf>, %26, %cst_18 [1] : vector<8x128xf32> to vector<8xf32>
    %29 = vector.shape_cast %28 : vector<8xf32> to vector<8x1xf32>
    %30 = vector.broadcast %29 : vector<8x1xf32> to vector<8x128xf32>
    %31 = arith.cmpf ole, %26, %30 : vector<8x128xf32>
    %c128_i32 = arith.constant 128 : i32
    %32 = vector.broadcast %c128_i32 : i32 to vector<8x128xi32>
    %33 = arith.select %31, %27, %32 : vector<8x128xi1>, vector<8x128xi32>
    %cst_19 = arith.constant dense<2147483647> : vector<8xi32>
    %34 = vector.multi_reduction <minsi>, %33, %cst_19 [1] : vector<8x128xi32> to vector<8xi32>
    %35 = vector.shape_cast %34 : vector<8xi32> to vector<8x1xi32>
    %36 = vector.broadcast %35 : vector<8x1xi32> to vector<8x128xi32>
    %37 = arith.cmpi eq, %27, %36 : vector<8x128xi32>
    %38 = arith.extui %37 : vector<8x128xi1> to vector<8x128xi32>
    %39 = arith.sitofp %38 : vector<8x128xi32> to vector<8x128xf32>
    %c0_20 = arith.constant 0 : index
    %c0_21 = arith.constant 0 : index
    %40 = vector.load %arg8[%c0_20, %c0_21] : memref<128x128xf32, #tpu.memory_space<vmem>>, vector<128x128xf32>
    %cst_22 = arith.constant dense<0.000000e+00> : vector<8x128xf32>
    %41 = tpu.matmul %39, %40, %cst_22 {dimension_numbers = #tpu.dot_dimension_numbers<[1], [0], [0], [1], [0, 0, 1, 1], [], []>} : vector<8x128xf32>, vector<128x128xf32>, vector<8x128xf32> -> vector<8x128xf32>
    %c0_23 = arith.constant 0 : index
    %c0_24 = arith.constant 0 : index
    %42 = vector.load %arg13[%c0_23, %c0_24] : memref<8x128xf32, #tpu.memory_space<vmem>>, vector<8x128xf32>
    tpu.vector_store %arg13[%c0_23, %c0_24], %41 {strides = array<i32>} : memref<8x128xf32, #tpu.memory_space<vmem>>, vector<8x128xf32>,
    %43 = vector.extract_strided_slice %41 {offsets = [0, 0], sizes = [8, 32], strides = [1, 1]} : vector<8x128xf32> to vector<8x32xf32>
    %44 = arith.truncf %39 : vector<8x128xf32> to vector<8x128xbf16>
    %c0_25 = arith.constant 0 : index
    %c0_26 = arith.constant 0 : index
    %45 = vector.load %arg9[%c0_25, %c0_26] : memref<128x512xbf16, #tpu.memory_space<vmem>>, vector<128x512xbf16>
    %cst_27 = arith.constant dense<0.000000e+00> : vector<8x512xf32>
    %46 = tpu.matmul %44, %45, %cst_27 {dimension_numbers = #tpu.dot_dimension_numbers<[1], [0], [0], [1], [0, 0, 1, 1], [], []>} : vector<8x128xbf16>, vector<128x512xbf16>, vector<8x512xf32> -> vector<8x512xf32>
    %cst_28 = arith.constant 0.000000e+00 : f32
    %47 = vector.broadcast %cst_28 : f32 to vector<8x512xf32>
    %48 = arith.maximumf %46, %47 : vector<8x512xf32>
    %49 = arith.truncf %48 : vector<8x512xf32> to vector<8x512xbf16>
    %c0_29 = arith.constant 0 : index
    %c0_30 = arith.constant 0 : index
    %50 = vector.load %arg10[%c0_29, %c0_30] : memref<512x128xbf16, #tpu.memory_space<vmem>>, vector<512x128xbf16>
    %cst_31 = arith.constant dense<0.000000e+00> : vector<8x128xf32>
    %51 = tpu.matmul %49, %50, %cst_31 {dimension_numbers = #tpu.dot_dimension_numbers<[1], [0], [0], [1], [0, 0, 1, 1], [], []>} : vector<8x512xbf16>, vector<512x128xbf16>, vector<8x128xf32> -> vector<8x128xf32>
    %c0_32 = arith.constant 0 : index
    %c0_33 = arith.constant 0 : index
    %52 = vector.load %arg11[%c0_32, %c0_33] : memref<1x128xf32, #tpu.memory_space<vmem>>, vector<1x128xf32>
    %53 = vector.broadcast %52 : vector<1x128xf32> to vector<8x128xf32>
    %54 = arith.addf %51, %53 : vector<8x128xf32>
    %c0_34 = arith.constant 0 : index
    %c0_35 = arith.constant 0 : index
    %55 = vector.load %arg12[%c0_34, %c0_35] : memref<8x128xf32, #tpu.memory_space<vmem>>, vector<8x128xf32>
    tpu.vector_store %arg12[%c0_34, %c0_35], %54 {strides = array<i32>} : memref<8x128xf32, #tpu.memory_space<vmem>>, vector<8x128xf32>,
    %c8_i32 = arith.constant 8 : i32
    %56 = arith.muli %arg0, %c8_i32 : i32
    %57 = tpu.iota {dimensions = array<i32: 0>} : vector<8x1xi32>
    %58 = vector.broadcast %56 : i32 to vector<8x1xi32>
    %59 = arith.addi %58, %57 : vector<8x1xi32>
    %c8_i32_36 = arith.constant 8 : i32
    %60 = vector.broadcast %c8_i32_36 : i32 to vector<8x1xi32>
    %61 = arith.cmpi slt, %59, %60 : vector<8x1xi32>
    %62 = arith.extui %61 : vector<8x1xi1> to vector<8x1xi32>
    %63 = arith.sitofp %62 : vector<8x1xi32> to vector<8x1xf32>
    %64 = arith.subf %54, %0 : vector<8x128xf32>
    %65 = arith.mulf %64, %64 : vector<8x128xf32>
    %66 = vector.broadcast %63 : vector<8x1xf32> to vector<8x128xf32>
    %67 = arith.mulf %66, %65 : vector<8x128xf32>
    %68 = vector.shape_cast %67 : vector<8x128xf32> to vector<1x8x128xf32>
    %cst_37 = arith.constant dense<0.000000e+00> : vector<1xf32>
    %69 = vector.multi_reduction <add>, %68, %cst_37 [1, 2] : vector<1x8x128xf32> to vector<1xf32>
    %70 = vector.shape_cast %69 : vector<1xf32> to vector<1x1x1xf32>
    %71 = vector.extract %70[0, 0, 0] : f32 from vector<1x1x1xf32>
    %72 = arith.subf %43, %14 : vector<8x32xf32>
    %73 = arith.mulf %72, %72 : vector<8x32xf32>
    %74 = vector.broadcast %63 : vector<8x1xf32> to vector<8x32xf32>
    %75 = arith.mulf %74, %73 : vector<8x32xf32>
    %76 = vector.shape_cast %75 : vector<8x32xf32> to vector<1x8x32xf32>
    %cst_38 = arith.constant dense<0.000000e+00> : vector<1xf32>
    %77 = vector.multi_reduction <add>, %76, %cst_38 [1, 2] : vector<1x8x32xf32> to vector<1xf32>
    %78 = vector.shape_cast %77 : vector<1xf32> to vector<1x1x1xf32>
    %79 = vector.extract %78[0, 0, 0] : f32 from vector<1x1x1xf32>
    %80 = tpu.iota {dimensions = array<i32: 1>} : vector<8x128xi32>
    %81 = tpu.iota {dimensions = array<i32: 0>} : vector<8x128xi32>
    %c0_i32 = arith.constant 0 : i32
    %82 = vector.broadcast %c0_i32 : i32 to vector<8x128xi32>
    %83 = arith.cmpi eq, %81, %82 : vector<8x128xi32>
    %c0_i32_39 = arith.constant 0 : i32
    %84 = vector.broadcast %c0_i32_39 : i32 to vector<8x128xi32>
    %85 = arith.cmpi eq, %80, %84 : vector<8x128xi32>
    %86 = arith.andi %83, %85 : vector<8x128xi1>
    %c1_i32 = arith.constant 1 : i32
    %87 = vector.broadcast %c1_i32 : i32 to vector<8x128xi32>
    %88 = arith.cmpi eq, %80, %87 : vector<8x128xi32>
    %89 = arith.andi %83, %88 : vector<8x128xi1>
    %cst_40 = arith.constant 0.000000e+00 : f32
    %90 = vector.broadcast %79 : f32 to vector<8x128xf32>
    %91 = vector.broadcast %cst_40 : f32 to vector<8x128xf32>
    %92 = arith.select %89, %90, %91 : vector<8x128xi1>, vector<8x128xf32>
    %93 = vector.broadcast %71 : f32 to vector<8x128xf32>
    %94 = arith.select %86, %93, %92 : vector<8x128xi1>, vector<8x128xf32>
    %c0_41 = arith.constant 0 : index
    %c0_42 = arith.constant 0 : index
    %95 = vector.load %arg14[%c0_41, %c0_42] : memref<8x128xf32, #tpu.memory_space<vmem>>, vector<8x128xf32>
    tpu.vector_store %arg14[%c0_41, %c0_42], %94 {strides = array<i32>} : memref<8x128xf32, #tpu.memory_space<vmem>>, vector<8x128xf32>,
    return
  }
  func.func @transform_0(%arg0: i32) -> (i32, i32) {
    %c0_i32 = arith.constant 0 : i32
    %c0_i32_0 = arith.constant 0 : i32
    return %arg0, %c0_i32 : i32, i32
  }
  func.func @transform_1(%arg0: i32) -> (i32, i32) {
    %c0_i32 = arith.constant 0 : i32
    %c0_i32_0 = arith.constant 0 : i32
    %c0_i32_1 = arith.constant 0 : i32
    return %c0_i32, %c0_i32_0 : i32, i32
  }
  func.func @transform_2(%arg0: i32) -> (i32, i32) {
    %c0_i32 = arith.constant 0 : i32
    %c0_i32_0 = arith.constant 0 : i32
    %c0_i32_1 = arith.constant 0 : i32
    return %c0_i32, %c0_i32_0 : i32, i32
  }
  func.func @transform_3(%arg0: i32) -> (i32, i32) {
    %c0_i32 = arith.constant 0 : i32
    %c0_i32_0 = arith.constant 0 : i32
    %c0_i32_1 = arith.constant 0 : i32
    return %c0_i32, %c0_i32_0 : i32, i32
  }
  func.func @transform_4(%arg0: i32) -> (i32, i32) {
    %c0_i32 = arith.constant 0 : i32
    %c0_i32_0 = arith.constant 0 : i32
    %c0_i32_1 = arith.constant 0 : i32
    return %c0_i32, %c0_i32_0 : i32, i32
  }
  func.func @transform_5(%arg0: i32) -> (i32, i32) {
    %c0_i32 = arith.constant 0 : i32
    %c0_i32_0 = arith.constant 0 : i32
    %c0_i32_1 = arith.constant 0 : i32
    return %c0_i32, %c0_i32_0 : i32, i32
  }
  func.func @transform_6(%arg0: i32) -> (i32, i32) {
    %c0_i32 = arith.constant 0 : i32
    %c0_i32_0 = arith.constant 0 : i32
    %c0_i32_1 = arith.constant 0 : i32
    return %c0_i32, %c0_i32_0 : i32, i32
  }
  func.func @transform_7(%arg0: i32) -> (i32, i32) {
    %c0_i32 = arith.constant 0 : i32
    %c0_i32_0 = arith.constant 0 : i32
    %c0_i32_1 = arith.constant 0 : i32
    return %c0_i32, %c0_i32_0 : i32, i32
  }
  func.func @transform_8(%arg0: i32) -> (i32, i32) {
    %c0_i32 = arith.constant 0 : i32
    %c0_i32_0 = arith.constant 0 : i32
    %c0_i32_1 = arith.constant 0 : i32
    return %c0_i32, %c0_i32_0 : i32, i32
  }
  func.func @transform_9(%arg0: i32) -> (i32, i32) {
    %c0_i32 = arith.constant 0 : i32
    %c0_i32_0 = arith.constant 0 : i32
    %c0_i32_1 = arith.constant 0 : i32
    return %c0_i32, %c0_i32_0 : i32, i32
  }
  func.func @transform_10(%arg0: i32) -> (i32, i32) {
    %c0_i32 = arith.constant 0 : i32
    %c0_i32_0 = arith.constant 0 : i32
    %c0_i32_1 = arith.constant 0 : i32
    return %c0_i32, %c0_i32_0 : i32, i32
  }
  func.func @transform_11(%arg0: i32) -> (i32, i32) {
    %c0_i32 = arith.constant 0 : i32
    %c0_i32_0 = arith.constant 0 : i32
    return %arg0, %c0_i32 : i32, i32
  }
  func.func @transform_12(%arg0: i32) -> (i32, i32) {
    %c0_i32 = arith.constant 0 : i32
    %c0_i32_0 = arith.constant 0 : i32
    return %arg0, %c0_i32 : i32, i32
  }
  func.func @transform_13(%arg0: i32) -> (i32, i32) {
    %c0_i32 = arith.constant 0 : i32
    %c0_i32_0 = arith.constant 0 : i32
    return %arg0, %c0_i32 : i32, i32
  }
}

</mosaic_0001>

<llo_original>
// kernel: tpu_custom_call.1
$region0: #{tpu_custom_call.1}
  #allocation0 [shape = 'u32[]', space=smem, size = 0x4, offset = 0x4, fixed_abs, tag = 'smem constant byte address 0x4 - core index']
  #allocation1 [shape = 'u32[144,128]{1,0:T(1,128)}', space=vmem, size = 0x12000, scoped, tag = 'internal scratch']
  %s0 = inlined_call_operand.vmem [shape: f32[8,128], index: 0, kind: input, shape index: {}]
  %s1 = inlined_call_operand.vmem [shape: bf16[128,512], index: 1, kind: input, shape index: {}]
  %s2 = inlined_call_operand.vmem [shape: f32[1,512], index: 2, kind: input, shape index: {}]
  %s3 = inlined_call_operand.vmem [shape: bf16[512,32], index: 3, kind: input, shape index: {}]
  %s4 = inlined_call_operand.vmem [shape: f32[1,32], index: 4, kind: input, shape index: {}]
  %s5 = inlined_call_operand.vmem [shape: f32[32,128], index: 5, kind: input, shape index: {}]
  %s6 = inlined_call_operand.vmem [shape: f32[1,128], index: 6, kind: input, shape index: {}]
  %s7 = inlined_call_operand.hbm [shape: f32[128,128], index: 7, kind: input, shape index: {}]
  %s8 = inlined_call_operand.hbm [shape: bf16[128,512], index: 8, kind: input, shape index: {}]
  %s9 = inlined_call_operand.hbm [shape: bf16[512,128], index: 9, kind: input, shape index: {}]
  %s10 = inlined_call_operand.vmem [shape: f32[1,128], index: 10, kind: input, shape index: {}]
  %s11 = inlined_call_operand.hbm [shape: f32[8,128], index: 11, kind: output, shape index: {0}]
  %s12 = inlined_call_operand.hbm [shape: f32[8,128], index: 12, kind: output, shape index: {1}]
  %s13 = inlined_call_operand.hbm [shape: f32[8,128], index: 13, kind: output, shape index: {2}]
  %14 = xla_tuple %s11, %s12, %s13
  %s15 = sld [smem:[#allocation0]]
  $region82: #{tpu_custom_call.1} parent=0
    _
  %s17 = ssub.s32 1, %s15
  %s18 = scalar_select 0, %s17, %s15
  $region1: #{tpu_custom_call.1} parent=0
    #allocation2 [shape = 'u8[65536]{0}', space=vmem, size = 0x10000, scoped, tag = 'input window, operand 7, single buffered']
    #allocation3 [shape = 's32[1]{0}', space=sflag, size = 0x4, scoped, tag = 'scoped memory for tpu_custom_call.1']
    #allocation4 [shape = 's32[1]{0}', space=sflag, size = 0x4, scoped, tag = 'scoped memory for tpu_custom_call.1']
    #allocation5 [shape = 'u8[131072]{0}', space=vmem, size = 0x20000, scoped, tag = 'input window, operand 8, single buffered']
    #allocation6 [shape = 's32[1]{0}', space=sflag, size = 0x4, scoped, tag = 'scoped memory for tpu_custom_call.1']
    #allocation7 [shape = 'u8[131072]{0}', space=vmem, size = 0x20000, scoped, tag = 'input window, operand 9, single buffered']
    #allocation8 [shape = 'u8[4096]{0}', space=vmem, size = 0x1000, scoped, tag = 'output window, operand 0, single buffered']
    #allocation9 [shape = 'u8[4096]{0}', space=vmem, size = 0x1000, scoped, tag = 'output window, operand 1, single buffered']
    #allocation10 [shape = 's32[1]{0}', space=sflag, size = 0x4, scoped, tag = 'scoped memory for tpu_custom_call.1']
    #allocation11 [shape = 'u8[4096]{0}', space=vmem, size = 0x1000, scoped, tag = 'output window, operand 2, single buffered']
    %19 = vsyncpa [#allocation3], 0
    %20 = vsyncpa [#allocation6], 0
    %21 = vsyncpa [#allocation4], 0
    %22 = vsyncpa [#allocation10], 0
    // Predicated region
    $region2: #{tpu_custom_call.1} parent=1 // pred_check
      _
    $region3: #{tpu_custom_call.1} parent=1 // pred_check_branch
      %24 = sbr.rel (0) target = $region5
    $region4: #{tpu_custom_call.1} parent=1 // pred_region
      _
    $region5: #{tpu_custom_call.1} parent=1 // pred_fallthru
      _
    // Predicated region
    $region6: #{tpu_custom_call.1} parent=1 // pred_check
      _
    $region7: #{tpu_custom_call.1} parent=1 // pred_check_branch
      %26 = sbr.rel (0) target = $region9
    $region8: #{tpu_custom_call.1} parent=1 // pred_region
      _
    $region9: #{tpu_custom_call.1} parent=1 // pred_fallthru
      _
    // Predicated region
    $region10: #{tpu_custom_call.1} parent=1 // pred_check
      _
    $region11: #{tpu_custom_call.1} parent=1 // pred_check_branch
      %28 = sbr.rel (0) target = $region13
    $region12: #{tpu_custom_call.1} parent=1 // pred_region
      _
    $region13: #{tpu_custom_call.1} parent=1 // pred_fallthru
      _
    // Predicated region
    $region14: #{tpu_custom_call.1} parent=1 // pred_check
      _
    $region15: #{tpu_custom_call.1} parent=1 // pred_check_branch
      %30 = sbr.rel (0) target = $region17
    $region16: #{tpu_custom_call.1} parent=1 // pred_region
      _
    $region17: #{tpu_custom_call.1} parent=1 // pred_fallthru
      _
    // Predicated region
    $region18: #{tpu_custom_call.1} parent=1 // pred_check
      _
    $region19: #{tpu_custom_call.1} parent=1 // pred_check_branch
      %32 = sbr.rel (0) target = $region21
    $region20: #{tpu_custom_call.1} parent=1 // pred_region
      _
    $region21: #{tpu_custom_call.1} parent=1 // pred_fallthru
      _
    // Predicated region
    $region22: #{tpu_custom_call.1} parent=1 // pred_check
      _
    $region23: #{tpu_custom_call.1} parent=1 // pred_check_branch
      %34 = sbr.rel (0) target = $region25
    $region24: #{tpu_custom_call.1} parent=1 // pred_region
      _
    $region25: #{tpu_custom_call.1} parent=1 // pred_fallthru
      _
    // Predicated region
    $region26: #{tpu_custom_call.1} parent=1 // pred_check
      _
    $region27: #{tpu_custom_call.1} parent=1 // pred_check_branch
      %36 = sbr.rel (0) target = $region29
    $region28: #{tpu_custom_call.1} parent=1 // pred_region
      _
    $region29: #{tpu_custom_call.1} parent=1 // pred_fallthru
      _
    // Predicated region
    $region30: #{tpu_custom_call.1} parent=1 // pred_check
      _
    $region31: #{tpu_custom_call.1} parent=1 // pred_check_branch
      %38 = sbr.rel (0) target = $region33
    $region32: #{tpu_custom_call.1} parent=1 // pred_region
      %s40 = ssub.s32 2048, 2048
      %41 = vsyncadd [#allocation3], %s40
      %s42 = sshll.u32 [#allocation2], 4
      %s43 = int_to_ptr.vmem [resolvable:$true] %s42
      %48 = dma.hbm_to_vmem [thread:$0]  %s7, 2048, %s43, [#allocation3], 128, 128, 8
    $region33: #{tpu_custom_call.1} parent=1 // pred_fallthru
      _
    // Predicated region
    $region34: #{tpu_custom_call.1} parent=1 // pred_check
      _
    $region35: #{tpu_custom_call.1} parent=1 // pred_check_branch
      %50 = sbr.rel (0) target = $region37
    $region36: #{tpu_custom_call.1} parent=1 // pred_region
      %s52 = ssub.s32 4096, 4096
      %53 = vsyncadd [#allocation6], %s52
      %s54 = sshll.u32 [#allocation5], 4
      %s55 = int_to_ptr.vmem [resolvable:$true] %s54
      %60 = dma.hbm_to_vmem [thread:$0]  %s8, 4096, %s55, [#allocation6], 256, 256, 16
    $region37: #{tpu_custom_call.1} parent=1 // pred_fallthru
      _
    // Predicated region
    $region38: #{tpu_custom_call.1} parent=1 // pred_check
      _
    $region39: #{tpu_custom_call.1} parent=1 // pred_check_branch
      %62 = sbr.rel (0) target = $region41
    $region40: #{tpu_custom_call.1} parent=1 // pred_region
      %s64 = ssub.s32 4096, 4096
      %65 = vsyncadd [#allocation6], %s64
      %s66 = sshll.u32 [#allocation7], 4
      %s67 = int_to_ptr.vmem [resolvable:$true] %s66
      %72 = dma.hbm_to_vmem [thread:$0]  %s9, 4096, %s67, [#allocation6], 64, 64, 4
    $region41: #{tpu_custom_call.1} parent=1 // pred_fallthru
      _
    // Predicated region
    $region42: #{tpu_custom_call.1} parent=1 // pred_check
      _
    $region43: #{tpu_custom_call.1} parent=1 // pred_check_branch
      %74 = sbr.rel (0) target = $region45
    $region44: #{tpu_custom_call.1} parent=1 // pred_region
      _
    $region45: #{tpu_custom_call.1} parent=1 // pred_fallthru
      _
    // Predicated region
    $region46: #{tpu_custom_call.1} parent=1 // pred_check
      _
    $region47: #{tpu_custom_call.1} parent=1 // pred_check_branch
      %76 = sbr.rel (0) target = $region49
    $region48: #{tpu_custom_call.1} parent=1 // pred_region
      %77 = dma.done [#allocation3], 2048
    $region49: #{tpu_custom_call.1} parent=1 // pred_fallthru
      _
    // Predicated region
    $region50: #{tpu_custom_call.1} parent=1 // pred_check
      _
    $region51: #{tpu_custom_call.1} parent=1 // pred_check_branch
      %79 = sbr.rel (0) target = $region53
    $region52: #{tpu_custom_call.1} parent=1 // pred_region
      %80 = dma.done [#allocation6], 4096
    $region53: #{tpu_custom_call.1} parent=1 // pred_fallthru
      _
    // Predicated region
    $region54: #{tpu_custom_call.1} parent=1 // pred_check
      _
    $region55: #{tpu_custom_call.1} parent=1 // pred_check_branch
      %82 = sbr.rel (0) target = $region57
    $region56: #{tpu_custom_call.1} parent=1 // pred_region
      %83 = dma.done [#allocation6], 4096
    $region57: #{tpu_custom_call.1} parent=1 // pred_fallthru
      _
    %v85 = vld [vmem:[%s0] sm:$0xff]
    %v86 = vpack.c.bf16 %v85, %v85
    %v87 = vld [vmem:[%s1] sm:$0xff]
    %v88 = vld [vmem:[%s1 + $0x8] sm:$0xff]
    %v89 = vld [vmem:[%s1 + $0x10] sm:$0xff]
    %v90 = vld [vmem:[%s1 + $0x18] sm:$0xff]
    %v91 = vld [vmem:[%s1 + $0x20] sm:$0xff]
    %v92 = vld [vmem:[%s1 + $0x28] sm:$0xff]
    %v93 = vld [vmem:[%s1 + $0x30] sm:$0xff]
    %v94 = vld [vmem:[%s1 + $0x38] sm:$0xff]
    %v95 = vld [vmem:[%s1 + $0x40] sm:$0xff]
    %v96 = vld [vmem:[%s1 + $0x48] sm:$0xff]
    %v97 = vld [vmem:[%s1 + $0x50] sm:$0xff]
    %v98 = vld [vmem:[%s1 + $0x58] sm:$0xff]
    %v99 = vld [vmem:[%s1 + $0x60] sm:$0xff]
    %v100 = vld [vmem:[%s1 + $0x68] sm:$0xff]
    %v101 = vld [vmem:[%s1 + $0x70] sm:$0xff]
    %v102 = vld [vmem:[%s1 + $0x78] sm:$0xff]
    %v103 = vld [vmem:[%s1 + $0x80] sm:$0xff]
    %v104 = vld [vmem:[%s1 + $0x88] sm:$0xff]
    %v105 = vld [vmem:[%s1 + $0x90] sm:$0xff]
    %v106 = vld [vmem:[%s1 + $0x98] sm:$0xff]
    %v107 = vld [vmem:[%s1 + $0xa0] sm:$0xff]
    %v108 = vld [vmem:[%s1 + $0xa8] sm:$0xff]
    %v109 = vld [vmem:[%s1 + $0xb0] sm:$0xff]
    %v110 = vld [vmem:[%s1 + $0xb8] sm:$0xff]
    %v111 = vld [vmem:[%s1 + $0xc0] sm:$0xff]
    %v112 = vld [vmem:[%s1 + $0xc8] sm:$0xff]
    %v113 = vld [vmem:[%s1 + $0xd0] sm:$0xff]
    %v114 = vld [vmem:[%s1 + $0xd8] sm:$0xff]
    %v115 = vld [vmem:[%s1 + $0xe0] sm:$0xff]
    %v116 = vld [vmem:[%s1 + $0xe8] sm:$0xff]
    %v117 = vld [vmem:[%s1 + $0xf0] sm:$0xff]
    %v118 = vld [vmem:[%s1 + $0xf8] sm:$0xff]
    %v119 = vld [vmem:[%s2] sm:$0xf]
    %v121 = vlaneseq
    %v122 = vshrl.u32 %v121, 7
    %v123 = vsub.s32 0, %v122
    %v124 = vrot.slane %v119, %v123
    %v125 = vlaneseq
    %v126 = vshrl.u32 %v125, 7
    %v127 = vsub.s32 1, %v126
    %v128 = vrot.slane %v119, %v127
    %v129 = vlaneseq
    %v130 = vshrl.u32 %v129, 7
    %v131 = vsub.s32 2, %v130
    %v132 = vrot.slane %v119, %v131
    %v133 = vlaneseq
    %v134 = vshrl.u32 %v133, 7
    %v135 = vsub.s32 3, %v134
    %v136 = vrot.slane %v119, %v135
    %v173 = vunpack.c.l.b16 %v87
    %v174 = vunpack.c.h.b16 %v87
    %v175 = vunpack.c.l.b16 %v88
    %v176 = vunpack.c.h.b16 %v88
    %v177 = vunpack.c.l.b16 %v89
    %v178 = vunpack.c.h.b16 %v89
    %v179 = vunpack.c.l.b16 %v90
    %v180 = vunpack.c.h.b16 %v90
    %v181 = vunpack.c.l.b16 %v91
    %v182 = vunpack.c.h.b16 %v91
    %v183 = vunpack.c.l.b16 %v92
    %v184 = vunpack.c.h.b16 %v92
    %v185 = vunpack.c.l.b16 %v93
    %v186 = vunpack.c.h.b16 %v93
    %v187 = vunpack.c.l.b16 %v94
    %v188 = vunpack.c.h.b16 %v94
    %v189 = vunpack.c.l.b16 %v95
    %v190 = vunpack.c.h.b16 %v95
    %v191 = vunpack.c.l.b16 %v96
    %v192 = vunpack.c.h.b16 %v96
    %v193 = vunpack.c.l.b16 %v97
    %v194 = vunpack.c.h.b16 %v97
    %v195 = vunpack.c.l.b16 %v98
    %v196 = vunpack.c.h.b16 %v98
    %v197 = vunpack.c.l.b16 %v99
    %v198 = vunpack.c.h.b16 %v99
    %v199 = vunpack.c.l.b16 %v100
    %v200 = vunpack.c.h.b16 %v100
    %v201 = vunpack.c.l.b16 %v101
    %v202 = vunpack.c.h.b16 %v101
    %v203 = vunpack.c.l.b16 %v102
    %v204 = vunpack.c.h.b16 %v102
    %v205 = vunpack.c.l.b16 %v103
    %v206 = vunpack.c.h.b16 %v103
    %v207 = vunpack.c.l.b16 %v104
    %v208 = vunpack.c.h.b16 %v104
    %v209 = vunpack.c.l.b16 %v105
    %v210 = vunpack.c.h.b16 %v105
    %v211 = vunpack.c.l.b16 %v106
    %v212 = vunpack.c.h.b16 %v106
    %v213 = vunpack.c.l.b16 %v107
    %v214 = vunpack.c.h.b16 %v107
    %v215 = vunpack.c.l.b16 %v108
    %v216 = vunpack.c.h.b16 %v108
    %v217 = vunpack.c.l.b16 %v109
    %v218 = vunpack.c.h.b16 %v109
    %v219 = vunpack.c.l.b16 %v110
    %v220 = vunpack.c.h.b16 %v110
    %v221 = vunpack.c.l.b16 %v111
    %v222 = vunpack.c.h.b16 %v111
    %v223 = vunpack.c.l.b16 %v112
    %v224 = vunpack.c.h.b16 %v112
    %v225 = vunpack.c.l.b16 %v113
    %v226 = vunpack.c.h.b16 %v113
    %v227 = vunpack.c.l.b16 %v114
    %v228 = vunpack.c.h.b16 %v114
    %v229 = vunpack.c.l.b16 %v115
    %v230 = vunpack.c.h.b16 %v115
    %v231 = vunpack.c.l.b16 %v116
    %v232 = vunpack.c.h.b16 %v116
    %v233 = vunpack.c.l.b16 %v117
    %v234 = vunpack.c.h.b16 %v117
    %v235 = vunpack.c.l.b16 %v118
    %v236 = vunpack.c.h.b16 %v118
    %v237 = vpack.c.b16 %v177, %v173
    %v238 = vpack.c.b16 %v178, %v174
    %v239 = vpack.c.b16 %v179, %v175
    %v240 = vpack.c.b16 %v180, %v176
    %v241 = vpack.c.b16 %v185, %v181
    %v242 = vpack.c.b16 %v186, %v182
    %v243 = vpack.c.b16 %v187, %v183
    %v244 = vpack.c.b16 %v188, %v184
    %v245 = vpack.c.b16 %v193, %v189
    %v246 = vpack.c.b16 %v194, %v190
    %v247 = vpack.c.b16 %v195, %v191
    %v248 = vpack.c.b16 %v196, %v192
    %v249 = vpack.c.b16 %v201, %v197
    %v250 = vpack.c.b16 %v202, %v198
    %v251 = vpack.c.b16 %v203, %v199
    %v252 = vpack.c.b16 %v204, %v200
    %v253 = vpack.c.b16 %v209, %v205
    %v254 = vpack.c.b16 %v210, %v206
    %v255 = vpack.c.b16 %v211, %v207
    %v256 = vpack.c.b16 %v212, %v208
    %v257 = vpack.c.b16 %v217, %v213
    %v258 = vpack.c.b16 %v218, %v214
    %v259 = vpack.c.b16 %v219, %v215
    %v260 = vpack.c.b16 %v220, %v216
    %v261 = vpack.c.b16 %v225, %v221
    %v262 = vpack.c.b16 %v226, %v222
    %v263 = vpack.c.b16 %v227, %v223
    %v264 = vpack.c.b16 %v228, %v224
    %v265 = vpack.c.b16 %v233, %v229
    %v266 = vpack.c.b16 %v234, %v230
    %v267 = vpack.c.b16 %v235, %v231
    %v268 = vpack.c.b16 %v236, %v232
    %301 = vmatprep.subr.bf16.mxu0 %v266
    %302 = vmatpush1.bf16.msra.mxu0 %v265
    %303 = vmatprep.subr.bf16.mxu0 %v262
    %304 = vmatpush1.bf16.msra.mxu0 %v261
    %305 = vmatprep.subr.bf16.mxu0 %v258
    %306 = vmatpush1.bf16.msra.mxu0 %v257
    %307 = vmatprep.subr.bf16.mxu0 %v254
    %308 = vmatpush1.bf16.msra.mxu0 %v253
    %309 = vmatprep.subr.bf16.mxu0 %v250
    %310 = vmatpush1.bf16.msra.mxu0 %v249
    %311 = vmatprep.subr.bf16.mxu0 %v246
    %312 = vmatpush1.bf16.msra.mxu0 %v245
    %313 = vmatprep.subr.bf16.mxu0 %v242
    %314 = vmatpush1.bf16.msra.mxu0 %v241
    %315 = vmatprep.subr.bf16.mxu0 %v238
    %316 = vmatpush1.bf16.msra.mxu0 %v237
    %317 = vmatprep.subr.bf16.mxu0 0
    %318 = vmatpush2.bf16.msra.mxu0 0
    %319 = vmatprep.subr.bf16.mxu0 0
    %320 = vmatpush2.bf16.msra.mxu0 0
    %321 = vmatprep.subr.bf16.mxu0 0
    %322 = vmatpush2.bf16.msra.mxu0 0
    %323 = vmatprep.subr.bf16.mxu0 0
    %324 = vmatpush2.bf16.msra.mxu0 0
    %325 = vmatprep.subr.bf16.mxu0 0
    %326 = vmatpush2.bf16.msra.mxu0 0
    %327 = vmatprep.subr.bf16.mxu0 0
    %328 = vmatpush2.bf16.msra.mxu0 0
    %329 = vmatprep.subr.bf16.mxu0 0
    %330 = vmatpush2.bf16.msra.mxu0 0
    %331 = vmatprep.subr.bf16.mxu0 0
    %332 = vmatpush2.bf16.msra.mxu0 0
    %333 = vmatprep.mubr.bf16.mxu0 0
    %334 = vmatmul.mubr.bf16.gmra.mxu0 %v86
    %v335 = vpop.f32.mrf.mxu0
    %v336 = vadd.f32 %v124, %v335
    %v337 = vpop.f32.mrf.mxu0
    %v338 = vadd.f32 %v128, %v337
    %v339 = vpop.f32.mrf.mxu0
    %v340 = vpop.f32.mrf.mxu0
    %341 = vdwg.mxu0
    %342 = vmatprep.subr.bf16.mxu0 %v268
    %343 = vmatpush1.bf16.msra.mxu0 %v267
    %344 = vmatprep.subr.bf16.mxu0 %v264
    %345 = vmatpush1.bf16.msra.mxu0 %v263
    %346 = vmatprep.subr.bf16.mxu0 %v260
    %347 = vmatpush1.bf16.msra.mxu0 %v259
    %348 = vmatprep.subr.bf16.mxu0 %v256
    %349 = vmatpush1.bf16.msra.mxu0 %v255
    %350 = vmatprep.subr.bf16.mxu0 %v252
    %351 = vmatpush1.bf16.msra.mxu0 %v251
    %352 = vmatprep.subr.bf16.mxu0 %v248
    %353 = vmatpush1.bf16.msra.mxu0 %v247
    %354 = vmatprep.subr.bf16.mxu0 %v244
    %355 = vmatpush1.bf16.msra.mxu0 %v243
    %356 = vmatprep.subr.bf16.mxu0 %v240
    %357 = vmatpush1.bf16.msra.mxu0 %v239
    %358 = vmatprep.subr.bf16.mxu0 0
    %359 = vmatpush2.bf16.msra.mxu0 0
    %360 = vmatprep.subr.bf16.mxu0 0
    %361 = vmatpush2.bf16.msra.mxu0 0
    %362 = vmatprep.subr.bf16.mxu0 0
    %363 = vmatpush2.bf16.msra.mxu0 0
    %364 = vmatprep.subr.bf16.mxu0 0
    %365 = vmatpush2.bf16.msra.mxu0 0
    %366 = vmatprep.subr.bf16.mxu0 0
    %367 = vmatpush2.bf16.msra.mxu0 0
    %368 = vmatprep.subr.bf16.mxu0 0
    %369 = vmatpush2.bf16.msra.mxu0 0
    %370 = vmatprep.subr.bf16.mxu0 0
    %371 = vmatpush2.bf16.msra.mxu0 0
    %372 = vmatprep.subr.bf16.mxu0 0
    %373 = vmatpush2.bf16.msra.mxu0 0
    %374 = vmatprep.mubr.bf16.mxu0 0
    %375 = vmatmul.mubr.bf16.gmra.mxu0 %v86
    %v376 = vpop.f32.mrf.mxu0
    %v377 = vadd.f32 %v132, %v376
    %v378 = vpop.f32.mrf.mxu0
    %v379 = vadd.f32 %v136, %v378
    %v380 = vpop.f32.mrf.mxu0
    %v381 = vpop.f32.mrf.mxu0
    %382 = vdwg.mxu0
    %v383 = vmax.f32 %v336, 0.0
    %v384 = vmax.f32 %v338, 0.0
    %v385 = vmax.f32 %v377, 0.0
    %v386 = vmax.f32 %v379, 0.0
    %v387 = vpack.c.bf16 %v383, %v383
    %v388 = vpack.c.bf16 %v384, %v384
    %v389 = vpack.c.bf16 %v385, %v385
    %v390 = vpack.c.bf16 %v386, %v386
    %v391 = vld [vmem:[%s3] sm:$0xf]
    %v392 = vld [vmem:[%s3 + $0x4] sm:$0xf]
    %v393 = vld [vmem:[%s3 + $0x8] sm:$0xf]
    %v394 = vld [vmem:[%s3 + $0xc] sm:$0xf]
    %v395 = vld [vmem:[%s3 + $0x10] sm:$0xf]
    %v396 = vld [vmem:[%s3 + $0x14] sm:$0xf]
    %v397 = vld [vmem:[%s3 + $0x18] sm:$0xf]
    %v398 = vld [vmem:[%s3 + $0x1c] sm:$0xf]
    %v399 = vld [vmem:[%s3 + $0x20] sm:$0xf]
    %v400 = vld [vmem:[%s3 + $0x24] sm:$0xf]
    %v401 = vld [vmem:[%s3 + $0x28] sm:$0xf]
    %v402 = vld [vmem:[%s3 + $0x2c] sm:$0xf]
    %v403 = vld [vmem:[%s3 + $0x30] sm:$0xf]
    %v404 = vld [vmem:[%s3 + $0x34] sm:$0xf]
    %v405 = vld [vmem:[%s3 + $0x38] sm:$0xf]
    %v406 = vld [vmem:[%s3 + $0x3c] sm:$0xf]
    %v407 = vld [vmem:[%s3 + $0x40] sm:$0xf]
    %v408 = vld [vmem:[%s3 + $0x44] sm:$0xf]
    %v409 = vld [vmem:[%s3 + $0x48] sm:$0xf]
    %v410 = vld [vmem:[%s3 + $0x4c] sm:$0xf]
    %v411 = vld [vmem:[%s3 + $0x50] sm:$0xf]
    %v412 = vld [vmem:[%s3 + $0x54] sm:$0xf]
    %v413 = vld [vmem:[%s3 + $0x58] sm:$0xf]
    %v414 = vld [vmem:[%s3 + $0x5c] sm:$0xf]
    %v415 = vld [vmem:[%s3 + $0x60] sm:$0xf]
    %v416 = vld [vmem:[%s3 + $0x64] sm:$0xf]
    %v417 = vld [vmem:[%s3 + $0x68] sm:$0xf]
    %v418 = vld [vmem:[%s3 + $0x6c] sm:$0xf]
    %v419 = vld [vmem:[%s3 + $0x70] sm:$0xf]
    %v420 = vld [vmem:[%s3 + $0x74] sm:$0xf]
    %v421 = vld [vmem:[%s3 + $0x78] sm:$0xf]
    %v422 = vld [vmem:[%s3 + $0x7c] sm:$0xf]
    %v423 = vld [vmem:[%s3 + $0x80] sm:$0xf]
    %v424 = vld [vmem:[%s3 + $0x84] sm:$0xf]
    %v425 = vld [vmem:[%s3 + $0x88] sm:$0xf]
    %v426 = vld [vmem:[%s3 + $0x8c] sm:$0xf]
    %v427 = vld [vmem:[%s3 + $0x90] sm:$0xf]
    %v428 = vld [vmem:[%s3 + $0x94] sm:$0xf]
    %v429 = vld [vmem:[%s3 + $0x98] sm:$0xf]
    %v430 = vld [vmem:[%s3 + $0x9c] sm:$0xf]
    %v431 = vld [vmem:[%s3 + $0xa0] sm:$0xf]
    %v432 = vld [vmem:[%s3 + $0xa4] sm:$0xf]
    %v433 = vld [vmem:[%s3 + $0xa8] sm:$0xf]
    %v434 = vld [vmem:[%s3 + $0xac] sm:$0xf]
    %v435 = vld [vmem:[%s3 + $0xb0] sm:$0xf]
    %v436 = vld [vmem:[%s3 + $0xb4] sm:$0xf]
    %v437 = vld [vmem:[%s3 + $0xb8] sm:$0xf]
    %v438 = vld [vmem:[%s3 + $0xbc] sm:$0xf]
    %v439 = vld [vmem:[%s3 + $0xc0] sm:$0xf]
    %v440 = vld [vmem:[%s3 + $0xc4] sm:$0xf]
    %v441 = vld [vmem:[%s3 + $0xc8] sm:$0xf]
    %v442 = vld [vmem:[%s3 + $0xcc] sm:$0xf]
    %v443 = vld [vmem:[%s3 + $0xd0] sm:$0xf]
    %v444 = vld [vmem:[%s3 + $0xd4] sm:$0xf]
    %v445 = vld [vmem:[%s3 + $0xd8] sm:$0xf]
    %v446 = vld [vmem:[%s3 + $0xdc] sm:$0xf]
    %v447 = vld [vmem:[%s3 + $0xe0] sm:$0xf]
    %v448 = vld [vmem:[%s3 + $0xe4] sm:$0xf]
    %v449 = vld [vmem:[%s3 + $0xe8] sm:$0xf]
    %v450 = vld [vmem:[%s3 + $0xec] sm:$0xf]
    %v451 = vld [vmem:[%s3 + $0xf0] sm:$0xf]
    %v452 = vld [vmem:[%s3 + $0xf4] sm:$0xf]
    %v453 = vld [vmem:[%s3 + $0xf8] sm:$0xf]
    %v454 = vld [vmem:[%s3 + $0xfc] sm:$0xf]
    %v455 = vld [vmem:[%s4] sm:$0x1]
    %v457 = vlaneseq
    %v458 = vshrl.u32 %v457, 7
    %v459 = vsub.s32 0, %v458
    %v460 = vrot.slane %v455, %v459
    %v526 = vunpack.c.l.b16 %v391
    %v527 = vunpack.c.l.b16 %v392
    %v528 = vunpack.c.l.b16 %v393
    %v529 = vunpack.c.l.b16 %v394
    %v530 = vunpack.c.l.b16 %v395
    %v531 = vunpack.c.l.b16 %v396
    %v532 = vunpack.c.l.b16 %v397
    %v533 = vunpack.c.l.b16 %v398
    %v534 = vunpack.c.l.b16 %v399
    %v535 = vunpack.c.l.b16 %v400
    %v536 = vunpack.c.l.b16 %v401
    %v537 = vunpack.c.l.b16 %v402
    %v538 = vunpack.c.l.b16 %v403
    %v539 = vunpack.c.l.b16 %v404
    %v540 = vunpack.c.l.b16 %v405
    %v541 = vunpack.c.l.b16 %v406
    %v542 = vunpack.c.l.b16 %v407
    %v543 = vunpack.c.l.b16 %v408
    %v544 = vunpack.c.l.b16 %v409
    %v545 = vunpack.c.l.b16 %v410
    %v546 = vunpack.c.l.b16 %v411
    %v547 = vunpack.c.l.b16 %v412
    %v548 = vunpack.c.l.b16 %v413
    %v549 = vunpack.c.l.b16 %v414
    %v550 = vunpack.c.l.b16 %v415
    %v551 = vunpack.c.l.b16 %v416
    %v552 = vunpack.c.l.b16 %v417
    %v553 = vunpack.c.l.b16 %v418
    %v554 = vunpack.c.l.b16 %v419
    %v555 = vunpack.c.l.b16 %v420
    %v556 = vunpack.c.l.b16 %v421
    %v557 = vunpack.c.l.b16 %v422
    %v558 = vunpack.c.l.b16 %v423
    %v559 = vunpack.c.l.b16 %v424
    %v560 = vunpack.c.l.b16 %v425
    %v561 = vunpack.c.l.b16 %v426
    %v562 = vunpack.c.l.b16 %v427
    %v563 = vunpack.c.l.b16 %v428
    %v564 = vunpack.c.l.b16 %v429
    %v565 = vunpack.c.l.b16 %v430
    %v566 = vunpack.c.l.b16 %v431
    %v567 = vunpack.c.l.b16 %v432
    %v568 = vunpack.c.l.b16 %v433
    %v569 = vunpack.c.l.b16 %v434
    %v570 = vunpack.c.l.b16 %v435
    %v571 = vunpack.c.l.b16 %v436
    %v572 = vunpack.c.l.b16 %v437
    %v573 = vunpack.c.l.b16 %v438
    %v574 = vunpack.c.l.b16 %v439
    %v575 = vunpack.c.l.b16 %v440
    %v576 = vunpack.c.l.b16 %v441
    %v577 = vunpack.c.l.b16 %v442
    %v578 = vunpack.c.l.b16 %v443
    %v579 = vunpack.c.l.b16 %v444
    %v580 = vunpack.c.l.b16 %v445
    %v581 = vunpack.c.l.b16 %v446
    %v582 = vunpack.c.l.b16 %v447
    %v583 = vunpack.c.l.b16 %v448
    %v584 = vunpack.c.l.b16 %v449
    %v585 = vunpack.c.l.b16 %v450
    %v586 = vunpack.c.l.b16 %v451
    %v587 = vunpack.c.l.b16 %v452
    %v588 = vunpack.c.l.b16 %v453
    %v589 = vunpack.c.l.b16 %v454
    %v590 = vpack.c.b16 %v527, %v526
    %v591 = vpack.c.b16 %v529, %v528
    %v592 = vpack.c.b16 %v531, %v530
    %v593 = vpack.c.b16 %v533, %v532
    %v594 = vpack.c.b16 %v535, %v534
    %v595 = vpack.c.b16 %v537, %v536
    %v596 = vpack.c.b16 %v539, %v538
    %v597 = vpack.c.b16 %v541, %v540
    %v598 = vpack.c.b16 %v543, %v542
    %v599 = vpack.c.b16 %v545, %v544
    %v600 = vpack.c.b16 %v547, %v546
    %v601 = vpack.c.b16 %v549, %v548
    %v602 = vpack.c.b16 %v551, %v550
    %v603 = vpack.c.b16 %v553, %v552
    %v604 = vpack.c.b16 %v555, %v554
    %v605 = vpack.c.b16 %v557, %v556
    %v606 = vpack.c.b16 %v559, %v558
    %v607 = vpack.c.b16 %v561, %v560
    %v608 = vpack.c.b16 %v563, %v562
    %v609 = vpack.c.b16 %v565, %v564
    %v610 = vpack.c.b16 %v567, %v566
    %v611 = vpack.c.b16 %v569, %v568
    %v612 = vpack.c.b16 %v571, %v570
    %v613 = vpack.c.b16 %v573, %v572
    %v614 = vpack.c.b16 %v575, %v574
    %v615 = vpack.c.b16 %v577, %v576
    %v616 = vpack.c.b16 %v579, %v578
    %v617 = vpack.c.b16 %v581, %v580
    %v618 = vpack.c.b16 %v583, %v582
    %v619 = vpack.c.b16 %v585, %v584
    %v620 = vpack.c.b16 %v587, %v586
    %v621 = vpack.c.b16 %v589, %v588
    %654 = vmatprep.subr.bf16.mxu0 0
    %655 = vmatpush1.bf16.msra.mxu0 %v597
    %656 = vmatprep.subr.bf16.mxu0 0
    %657 = vmatpush1.bf16.msra.mxu0 %v596
    %658 = vmatprep.subr.bf16.mxu0 0
    %659 = vmatpush1.bf16.msra.mxu0 %v595
    %660 = vmatprep.subr.bf16.mxu0 0
    %661 = vmatpush1.bf16.msra.mxu0 %v594
    %662 = vmatprep.subr.bf16.mxu0 0
    %663 = vmatpush1.bf16.msra.mxu0 %v593
    %664 = vmatprep.subr.bf16.mxu0 0
    %665 = vmatpush1.bf16.msra.mxu0 %v592
    %666 = vmatprep.subr.bf16.mxu0 0
    %667 = vmatpush1.bf16.msra.mxu0 %v591
    %668 = vmatprep.subr.bf16.mxu0 0
    %669 = vmatpush1.bf16.msra.mxu0 %v590
    %670 = vmatprep.subr.bf16.mxu0 0
    %671 = vmatpush2.bf16.msra.mxu0 %v605
    %672 = vmatprep.subr.bf16.mxu0 0
    %673 = vmatpush2.bf16.msra.mxu0 %v604
    %674 = vmatprep.subr.bf16.mxu0 0
    %675 = vmatpush2.bf16.msra.mxu0 %v603
    %676 = vmatprep.subr.bf16.mxu0 0
    %677 = vmatpush2.bf16.msra.mxu0 %v602
    %678 = vmatprep.subr.bf16.mxu0 0
    %679 = vmatpush2.bf16.msra.mxu0 %v601
    %680 = vmatprep.subr.bf16.mxu0 0
    %681 = vmatpush2.bf16.msra.mxu0 %v600
    %682 = vmatprep.subr.bf16.mxu0 0
    %683 = vmatpush2.bf16.msra.mxu0 %v599
    %684 = vmatprep.subr.bf16.mxu0 0
    %685 = vmatpush2.bf16.msra.mxu0 %v598
    %686 = vmatprep.mubr.bf16.mxu0 %v388
    %687 = vmatmul.mubr.bf16.gmra.mxu0 %v387
    %v688 = vpop.f32.mrf.mxu0
    %v689 = vadd.f32 %v460, %v688
    %v690 = vpop.f32.mrf.mxu0
    %v691 = vpop.f32.mrf.mxu0
    %v692 = vpop.f32.mrf.mxu0
    %693 = vdwg.mxu0
    %694 = vmatprep.subr.bf16.mxu0 0
    %695 = vmatpush1.bf16.msra.mxu0 %v613
    %696 = vmatprep.subr.bf16.mxu0 0
    %697 = vmatpush1.bf16.msra.mxu0 %v612
    %698 = vmatprep.subr.bf16.mxu0 0
    %699 = vmatpush1.bf16.msra.mxu0 %v611
    %700 = vmatprep.subr.bf16.mxu0 0
    %701 = vmatpush1.bf16.msra.mxu0 %v610
    %702 = vmatprep.subr.bf16.mxu0 0
    %703 = vmatpush1.bf16.msra.mxu0 %v609
    %704 = vmatprep.subr.bf16.mxu0 0
    %705 = vmatpush1.bf16.msra.mxu0 %v608
    %706 = vmatprep.subr.bf16.mxu0 0
    %707 = vmatpush1.bf16.msra.mxu0 %v607
    %708 = vmatprep.subr.bf16.mxu0 0
    %709 = vmatpush1.bf16.msra.mxu0 %v606
    %710 = vmatprep.subr.bf16.mxu0 0
    %711 = vmatpush2.bf16.msra.mxu0 %v621
    %712 = vmatprep.subr.bf16.mxu0 0
    %713 = vmatpush2.bf16.msra.mxu0 %v620
    %714 = vmatprep.subr.bf16.mxu0 0
    %715 = vmatpush2.bf16.msra.mxu0 %v619
    %716 = vmatprep.subr.bf16.mxu0 0
    %717 = vmatpush2.bf16.msra.mxu0 %v618
    %718 = vmatprep.subr.bf16.mxu0 0
    %719 = vmatpush2.bf16.msra.mxu0 %v617
    %720 = vmatprep.subr.bf16.mxu0 0
    %721 = vmatpush2.bf16.msra.mxu0 %v616
    %722 = vmatprep.subr.bf16.mxu0 0
    %723 = vmatpush2.bf16.msra.mxu0 %v615
    %724 = vmatprep.subr.bf16.mxu0 0
    %725 = vmatpush2.bf16.msra.mxu0 %v614
    %726 = vmatprep.mubr.bf16.mxu0 %v390
    %727 = vmatmul.mubr.bf16.gmra.mxu0 %v389
    %v728 = vpop.f32.mrf.mxu0
    %v729 = vadd.f32 %v689, %v728
    %v730 = vpop.f32.mrf.mxu0
    %v731 = vpop.f32.mrf.mxu0
    %v732 = vpop.f32.mrf.mxu0
    %733 = vdwg.mxu0
    %v734 = vmul.f32 %v729, %v729
    %vm735 = vcmask 261120
    %v736 = vsel %vm735, %v734, 0.0
    %737 = vadd.xlane.f32.xlu0 %v736
    %v738 = vpop.xlane.xlu0 %737
    %v739 = vld [vmem:[%s5] sm:$0xff]
    %v740 = vld [vmem:[%s5 + $0x8] sm:$0xff]
    %v741 = vld [vmem:[%s5 + $0x10] sm:$0xff]
    %v742 = vld [vmem:[%s5 + $0x18] sm:$0xff]
    %v744 = vsel %vm735, %v729, 0
    %746 = vmatprep.subr.mxu0 0.0
    %747 = vmatpush1.msra.mxu0 0.0
    %748 = vmatprep.subr.mxu0 0.0
    %749 = vmatpush1.msra.mxu0 0.0
    %750 = vmatprep.subr.mxu0 0.0
    %751 = vmatpush1.msra.mxu0 0.0
    %752 = vmatprep.subr.mxu0 0.0
    %753 = vmatpush1.msra.mxu0 0.0
    %754 = vmatprep.subr.mxu0 0.0
    %755 = vmatpush1.msra.mxu0 0.0
    %756 = vmatprep.subr.mxu0 0.0
    %757 = vmatpush1.msra.mxu0 0.0
    %758 = vmatprep.subr.mxu0 0.0
    %759 = vmatpush1.msra.mxu0 0.0
    %760 = vmatprep.subr.mxu0 0.0
    %761 = vmatpush1.msra.mxu0 0.0
    %762 = vmatprep.subr.mxu0 0.0
    %763 = vmatpush1.msra.mxu0 0.0
    %764 = vmatprep.subr.mxu0 0.0
    %765 = vmatpush1.msra.mxu0 0.0
    %766 = vmatprep.subr.mxu0 0.0
    %767 = vmatpush1.msra.mxu0 0.0
    %768 = vmatprep.subr.mxu0 0.0
    %769 = vmatpush1.msra.mxu0 0.0
    %770 = vmatprep.subr.mxu0 0.0
    %771 = vmatpush1.msra.mxu0 %v742
    %772 = vmatprep.subr.mxu0 0.0
    %773 = vmatpush1.msra.mxu0 %v741
    %774 = vmatprep.subr.mxu0 0.0
    %775 = vmatpush1.msra.mxu0 %v740
    %776 = vmatprep.subr.mxu0 0.0
    %777 = vmatpush1.msra.mxu0 %v739
    %778 = vmatprep.subr.mxu0 0.0
    %779 = vmatpush2.msra.mxu0 0.0
    %780 = vmatprep.subr.mxu0 0.0
    %781 = vmatpush2.msra.mxu0 0.0
    %782 = vmatprep.subr.mxu0 0.0
    %783 = vmatpush2.msra.mxu0 0.0
    %784 = vmatprep.subr.mxu0 0.0
    %785 = vmatpush2.msra.mxu0 0.0
    %786 = vmatprep.subr.mxu0 0.0
    %787 = vmatpush2.msra.mxu0 0.0
    %788 = vmatprep.subr.mxu0 0.0
    %789 = vmatpush2.msra.mxu0 0.0
    %790 = vmatprep.subr.mxu0 0.0
    %791 = vmatpush2.msra.mxu0 0.0
    %792 = vmatprep.subr.mxu0 0.0
    %793 = vmatpush2.msra.mxu0 0.0
    %794 = vmatprep.subr.mxu0 0.0
    %795 = vmatpush2.msra.mxu0 0.0
    %796 = vmatprep.subr.mxu0 0.0
    %797 = vmatpush2.msra.mxu0 0.0
    %798 = vmatprep.subr.mxu0 0.0
    %799 = vmatpush2.msra.mxu0 0.0
    %800 = vmatprep.subr.mxu0 0.0
    %801 = vmatpush2.msra.mxu0 0.0
    %802 = vmatprep.subr.mxu0 0.0
    %803 = vmatpush2.msra.mxu0 0.0
    %804 = vmatprep.subr.mxu0 0.0
    %805 = vmatpush2.msra.mxu0 0.0
    %806 = vmatprep.subr.mxu0 0.0
    %807 = vmatpush2.msra.mxu0 0.0
    %808 = vmatprep.subr.mxu0 0.0
    %809 = vmatpush2.msra.mxu0 0.0
    %810 = vmatprep.mubr.f32.mxu0 0.0
    %811 = vmatmul.mubr.f32.gmra.mxu0 %v744
    %v812 = vpop.f32.mrf.mxu0
    %v813 = vadd.f32 0.0, %v812
    %v814 = vpop.f32.mrf.mxu0
    %815 = vdwg.mxu0
    %v816 = vld [vmem:[%s6] sm:$0x1]
    %v818 = vlaneseq
    %v819 = vshrl.u32 %v818, 7
    %v820 = vsub.s32 0, %v819
    %v821 = vrot.slane %v816, %v820
    %v823 = vadd.f32 %v738, %v821
    %v824 = vmul.f32 %v813, 2.0
    %v825 = vsub.f32 %v823, %v824
    %v826 = vlaneseq
    %v827 = vand.u32 %v826, 127
    %828 = vmin.xlane.f32.xlu0 %v825
    %v829 = vpop.xlane.xlu0 %828
    %vm830 = vcmp.le.f32.partialorder %v825, %v829
    %v831 = vsel %vm830, %v827, 128
    %v832 = vand.u32 %v831, 65535
    %v833 = vshra.s32 %v831, 16
    %v834 = vcvt.s32.f32 %v832
    %v835 = vcvt.s32.f32 %v833
    %836 = vmin.xlane.f32.xlu0 %v835
    %v837 = vpop.xlane.xlu0 %836
    %vm838 = vcmp.eq.f32.partialorder %v835, %v837
    %v839 = vsel %vm838, %v834, inf
    %840 = vmin.xlane.f32.xlu0 %v839
    %v841 = vpop.xlane.xlu0 %840
    %v842 = vcvt.f32.s32 %v841
    %v843 = vcvt.f32.s32 %v837
    %v844 = vshll.u32 %v843, 16
    %v845 = vadd.s32 %v844, %v842
    %vm846 = vcmp.eq.s32.totalorder %v827, %v845
    %v847 = vsel %vm846, 1, 0
    %v848 = vcvt.s32.f32 %v847
    %v849 = vld [vmem:[#allocation2] sm:$0xff]
    %v850 = vld [vmem:[#allocation2 + $0x8] sm:$0xff]
    %v851 = vld [vmem:[#allocation2 + $0x10] sm:$0xff]
    %v852 = vld [vmem:[#allocation2 + $0x18] sm:$0xff]
    %v853 = vld [vmem:[#allocation2 + $0x20] sm:$0xff]
    %v854 = vld [vmem:[#allocation2 + $0x28] sm:$0xff]
    %v855 = vld [vmem:[#allocation2 + $0x30] sm:$0xff]
    %v856 = vld [vmem:[#allocation2 + $0x38] sm:$0xff]
    %v857 = vld [vmem:[#allocation2 + $0x40] sm:$0xff]
    %v858 = vld [vmem:[#allocation2 + $0x48] sm:$0xff]
    %v859 = vld [vmem:[#allocation2 + $0x50] sm:$0xff]
    %v860 = vld [vmem:[#allocation2 + $0x58] sm:$0xff]
    %v861 = vld [vmem:[#allocation2 + $0x60] sm:$0xff]
    %v862 = vld [vmem:[#allocation2 + $0x68] sm:$0xff]
    %v863 = vld [vmem:[#allocation2 + $0x70] sm:$0xff]
    %v864 = vld [vmem:[#allocation2 + $0x78] sm:$0xff]
    %865 = vmatprep.subr.mxu0 0.0
    %866 = vmatpush1.msra.mxu0 %v864
    %867 = vmatprep.subr.mxu0 0.0
    %868 = vmatpush1.msra.mxu0 %v863
    %869 = vmatprep.subr.mxu0 0.0
    %870 = vmatpush1.msra.mxu0 %v862
    %871 = vmatprep.subr.mxu0 0.0
    %872 = vmatpush1.msra.mxu0 %v861
    %873 = vmatprep.subr.mxu0 0.0
    %874 = vmatpush1.msra.mxu0 %v860
    %875 = vmatprep.subr.mxu0 0.0
    %876 = vmatpush1.msra.mxu0 %v859
    %877 = vmatprep.subr.mxu0 0.0
    %878 = vmatpush1.msra.mxu0 %v858
    %879 = vmatprep.subr.mxu0 0.0
    %880 = vmatpush1.msra.mxu0 %v857
    %881 = vmatprep.subr.mxu0 0.0
    %882 = vmatpush1.msra.mxu0 %v856
    %883 = vmatprep.subr.mxu0 0.0
    %884 = vmatpush1.msra.mxu0 %v855
    %885 = vmatprep.subr.mxu0 0.0
    %886 = vmatpush1.msra.mxu0 %v854
    %887 = vmatprep.subr.mxu0 0.0
    %888 = vmatpush1.msra.mxu0 %v853
    %889 = vmatprep.subr.mxu0 0.0
    %890 = vmatpush1.msra.mxu0 %v852
    %891 = vmatprep.subr.mxu0 0.0
    %892 = vmatpush1.msra.mxu0 %v851
    %893 = vmatprep.subr.mxu0 0.0
    %894 = vmatpush1.msra.mxu0 %v850
    %895 = vmatprep.subr.mxu0 0.0
    %896 = vmatpush1.msra.mxu0 %v849
    %897 = vmatprep.subr.mxu0 0.0
    %898 = vmatpush2.msra.mxu0 0.0
    %899 = vmatprep.subr.mxu0 0.0
    %900 = vmatpush2.msra.mxu0 0.0
    %901 = vmatprep.subr.mxu0 0.0
    %902 = vmatpush2.msra.mxu0 0.0
    %903 = vmatprep.subr.mxu0 0.0
    %904 = vmatpush2.msra.mxu0 0.0
    %905 = vmatprep.subr.mxu0 0.0
    %906 = vmatpush2.msra.mxu0 0.0
    %907 = vmatprep.subr.mxu0 0.0
    %908 = vmatpush2.msra.mxu0 0.0
    %909 = vmatprep.subr.mxu0 0.0
    %910 = vmatpush2.msra.mxu0 0.0
    %911 = vmatprep.subr.mxu0 0.0
    %912 = vmatpush2.msra.mxu0 0.0
    %913 = vmatprep.subr.mxu0 0.0
    %914 = vmatpush2.msra.mxu0 0.0
    %915 = vmatprep.subr.mxu0 0.0
    %916 = vmatpush2.msra.mxu0 0.0
    %917 = vmatprep.subr.mxu0 0.0
    %918 = vmatpush2.msra.mxu0 0.0
    %919 = vmatprep.subr.mxu0 0.0
    %920 = vmatpush2.msra.mxu0 0.0
    %921 = vmatprep.subr.mxu0 0.0
    %922 = vmatpush2.msra.mxu0 0.0
    %923 = vmatprep.subr.mxu0 0.0
    %924 = vmatpush2.msra.mxu0 0.0
    %925 = vmatprep.subr.mxu0 0.0
    %926 = vmatpush2.msra.mxu0 0.0
    %927 = vmatprep.subr.mxu0 0.0
    %928 = vmatpush2.msra.mxu0 0.0
    %929 = vmatprep.mubr.f32.mxu0 0.0
    %930 = vmatmul.mubr.f32.gmra.mxu0 %v848
    %v931 = vpop.f32.mrf.mxu0
    %v932 = vadd.f32 0.0, %v931
    %v933 = vpop.f32.mrf.mxu0
    %934 = vdwg.mxu0
    %935 = vst [vmem:[#allocation9] sm:$0xff] %v932
    %v936 = vpack.c.bf16 %v848, %v848
    %v937 = vld [vmem:[#allocation5] sm:$0xff]
    %v938 = vld [vmem:[#allocation5 + $0x8] sm:$0xff]
    %v939 = vld [vmem:[#allocation5 + $0x10] sm:$0xff]
    %v940 = vld [vmem:[#allocation5 + $0x18] sm:$0xff]
    %v941 = vld [vmem:[#allocation5 + $0x20] sm:$0xff]
    %v942 = vld [vmem:[#allocation5 + $0x28] sm:$0xff]
    %v943 = vld [vmem:[#allocation5 + $0x30] sm:$0xff]
    %v944 = vld [vmem:[#allocation5 + $0x38] sm:$0xff]
    %v945 = vld [vmem:[#allocation5 + $0x40] sm:$0xff]
    %v946 = vld [vmem:[#allocation5 + $0x48] sm:$0xff]
    %v947 = vld [vmem:[#allocation5 + $0x50] sm:$0xff]
    %v948 = vld [vmem:[#allocation5 + $0x58] sm:$0xff]
    %v949 = vld [vmem:[#allocation5 + $0x60] sm:$0xff]
    %v950 = vld [vmem:[#allocation5 + $0x68] sm:$0xff]
    %v951 = vld [vmem:[#allocation5 + $0x70] sm:$0xff]
    %v952 = vld [vmem:[#allocation5 + $0x78] sm:$0xff]
    %v953 = vld [vmem:[#allocation5 + $0x80] sm:$0xff]
    %v954 = vld [vmem:[#allocation5 + $0x88] sm:$0xff]
    %v955 = vld [vmem:[#allocation5 + $0x90] sm:$0xff]
    %v956 = vld [vmem:[#allocation5 + $0x98] sm:$0xff]
    %v957 = vld [vmem:[#allocation5 + $0xa0] sm:$0xff]
    %v958 = vld [vmem:[#allocation5 + $0xa8] sm:$0xff]
    %v959 = vld [vmem:[#allocation5 + $0xb0] sm:$0xff]
    %v960 = vld [vmem:[#allocation5 + $0xb8] sm:$0xff]
    %v961 = vld [vmem:[#allocation5 + $0xc0] sm:$0xff]
    %v962 = vld [vmem:[#allocation5 + $0xc8] sm:$0xff]
    %v963 = vld [vmem:[#allocation5 + $0xd0] sm:$0xff]
    %v964 = vld [vmem:[#allocation5 + $0xd8] sm:$0xff]
    %v965 = vld [vmem:[#allocation5 + $0xe0] sm:$0xff]
    %v966 = vld [vmem:[#allocation5 + $0xe8] sm:$0xff]
    %v967 = vld [vmem:[#allocation5 + $0xf0] sm:$0xff]
    %v968 = vld [vmem:[#allocation5 + $0xf8] sm:$0xff]
    %v1001 = vunpack.c.l.b16 %v937
    %v1002 = vunpack.c.h.b16 %v937
    %v1003 = vunpack.c.l.b16 %v938
    %v1004 = vunpack.c.h.b16 %v938
    %v1005 = vunpack.c.l.b16 %v939
    %v1006 = vunpack.c.h.b16 %v939
    %v1007 = vunpack.c.l.b16 %v940
    %v1008 = vunpack.c.h.b16 %v940
    %v1009 = vunpack.c.l.b16 %v941
    %v1010 = vunpack.c.h.b16 %v941
    %v1011 = vunpack.c.l.b16 %v942
    %v1012 = vunpack.c.h.b16 %v942
    %v1013 = vunpack.c.l.b16 %v943
    %v1014 = vunpack.c.h.b16 %v943
    %v1015 = vunpack.c.l.b16 %v944
    %v1016 = vunpack.c.h.b16 %v944
    %v1017 = vunpack.c.l.b16 %v945
    %v1018 = vunpack.c.h.b16 %v945
    %v1019 = vunpack.c.l.b16 %v946
    %v1020 = vunpack.c.h.b16 %v946
    %v1021 = vunpack.c.l.b16 %v947
    %v1022 = vunpack.c.h.b16 %v947
    %v1023 = vunpack.c.l.b16 %v948
    %v1024 = vunpack.c.h.b16 %v948
    %v1025 = vunpack.c.l.b16 %v949
    %v1026 = vunpack.c.h.b16 %v949
    %v1027 = vunpack.c.l.b16 %v950
    %v1028 = vunpack.c.h.b16 %v950
    %v1029 = vunpack.c.l.b16 %v951
    %v1030 = vunpack.c.h.b16 %v951
    %v1031 = vunpack.c.l.b16 %v952
    %v1032 = vunpack.c.h.b16 %v952
    %v1033 = vunpack.c.l.b16 %v953
    %v1034 = vunpack.c.h.b16 %v953
    %v1035 = vunpack.c.l.b16 %v954
    %v1036 = vunpack.c.h.b16 %v954
    %v1037 = vunpack.c.l.b16 %v955
    %v1038 = vunpack.c.h.b16 %v955
    %v1039 = vunpack.c.l.b16 %v956
    %v1040 = vunpack.c.h.b16 %v956
    %v1041 = vunpack.c.l.b16 %v957
    %v1042 = vunpack.c.h.b16 %v957
    %v1043 = vunpack.c.l.b16 %v958
    %v1044 = vunpack.c.h.b16 %v958
    %v1045 = vunpack.c.l.b16 %v959
    %v1046 = vunpack.c.h.b16 %v959
    %v1047 = vunpack.c.l.b16 %v960
    %v1048 = vunpack.c.h.b16 %v960
    %v1049 = vunpack.c.l.b16 %v961
    %v1050 = vunpack.c.h.b16 %v961
    %v1051 = vunpack.c.l.b16 %v962
    %v1052 = vunpack.c.h.b16 %v962
    %v1053 = vunpack.c.l.b16 %v963
    %v1054 = vunpack.c.h.b16 %v963
    %v1055 = vunpack.c.l.b16 %v964
    %v1056 = vunpack.c.h.b16 %v964
    %v1057 = vunpack.c.l.b16 %v965
    %v1058 = vunpack.c.h.b16 %v965
    %v1059 = vunpack.c.l.b16 %v966
    %v1060 = vunpack.c.h.b16 %v966
    %v1061 = vunpack.c.l.b16 %v967
    %v1062 = vunpack.c.h.b16 %v967
    %v1063 = vunpack.c.l.b16 %v968
    %v1064 = vunpack.c.h.b16 %v968
    %v1065 = vpack.c.b16 %v1005, %v1001
    %v1066 = vpack.c.b16 %v1006, %v1002
    %v1067 = vpack.c.b16 %v1007, %v1003
    %v1068 = vpack.c.b16 %v1008, %v1004
    %v1069 = vpack.c.b16 %v1013, %v1009
    %v1070 = vpack.c.b16 %v1014, %v1010
    %v1071 = vpack.c.b16 %v1015, %v1011
    %v1072 = vpack.c.b16 %v1016, %v1012
    %v1073 = vpack.c.b16 %v1021, %v1017
    %v1074 = vpack.c.b16 %v1022, %v1018
    %v1075 = vpack.c.b16 %v1023, %v1019
    %v1076 = vpack.c.b16 %v1024, %v1020
    %v1077 = vpack.c.b16 %v1029, %v1025
    %v1078 = vpack.c.b16 %v1030, %v1026
    %v1079 = vpack.c.b16 %v1031, %v1027
    %v1080 = vpack.c.b16 %v1032, %v1028
    %v1081 = vpack.c.b16 %v1037, %v1033
    %v1082 = vpack.c.b16 %v1038, %v1034
    %v1083 = vpack.c.b16 %v1039, %v1035
    %v1084 = vpack.c.b16 %v1040, %v1036
    %v1085 = vpack.c.b16 %v1045, %v1041
    %v1086 = vpack.c.b16 %v1046, %v1042
    %v1087 = vpack.c.b16 %v1047, %v1043
    %v1088 = vpack.c.b16 %v1048, %v1044
    %v1089 = vpack.c.b16 %v1053, %v1049
    %v1090 = vpack.c.b16 %v1054, %v1050
    %v1091 = vpack.c.b16 %v1055, %v1051
    %v1092 = vpack.c.b16 %v1056, %v1052
    %v1093 = vpack.c.b16 %v1061, %v1057
    %v1094 = vpack.c.b16 %v1062, %v1058
    %v1095 = vpack.c.b16 %v1063, %v1059
    %v1096 = vpack.c.b16 %v1064, %v1060
    %1129 = vmatprep.subr.bf16.mxu0 %v1094
    %1130 = vmatpush1.bf16.msra.mxu0 %v1093
    %1131 = vmatprep.subr.bf16.mxu0 %v1090
    %1132 = vmatpush1.bf16.msra.mxu0 %v1089
    %1133 = vmatprep.subr.bf16.mxu0 %v1086
    %1134 = vmatpush1.bf16.msra.mxu0 %v1085
    %1135 = vmatprep.subr.bf16.mxu0 %v1082
    %1136 = vmatpush1.bf16.msra.mxu0 %v1081
    %1137 = vmatprep.subr.bf16.mxu0 %v1078
    %1138 = vmatpush1.bf16.msra.mxu0 %v1077
    %1139 = vmatprep.subr.bf16.mxu0 %v1074
    %1140 = vmatpush1.bf16.msra.mxu0 %v1073
    %1141 = vmatprep.subr.bf16.mxu0 %v1070
    %1142 = vmatpush1.bf16.msra.mxu0 %v1069
    %1143 = vmatprep.subr.bf16.mxu0 %v1066
    %1144 = vmatpush1.bf16.msra.mxu0 %v1065
    %1145 = vmatprep.subr.bf16.mxu0 0
    %1146 = vmatpush2.bf16.msra.mxu0 0
    %1147 = vmatprep.subr.bf16.mxu0 0
    %1148 = vmatpush2.bf16.msra.mxu0 0
    %1149 = vmatprep.subr.bf16.mxu0 0
    %1150 = vmatpush2.bf16.msra.mxu0 0
    %1151 = vmatprep.subr.bf16.mxu0 0
    %1152 = vmatpush2.bf16.msra.mxu0 0
    %1153 = vmatprep.subr.bf16.mxu0 0
    %1154 = vmatpush2.bf16.msra.mxu0 0
    %1155 = vmatprep.subr.bf16.mxu0 0
    %1156 = vmatpush2.bf16.msra.mxu0 0
    %1157 = vmatprep.subr.bf16.mxu0 0
    %1158 = vmatpush2.bf16.msra.mxu0 0
    %1159 = vmatprep.subr.bf16.mxu0 0
    %1160 = vmatpush2.bf16.msra.mxu0 0
    %1161 = vmatprep.mubr.bf16.mxu0 0
    %1162 = vmatmul.mubr.bf16.gmra.mxu0 %v936
    %v1163 = vpop.f32.mrf.mxu0
    %v1164 = vadd.f32 0.0, %v1163
    %v1165 = vpop.f32.mrf.mxu0
    %v1166 = vadd.f32 0.0, %v1165
    %v1167 = vpop.f32.mrf.mxu0
    %v1168 = vpop.f32.mrf.mxu0
    %1169 = vdwg.mxu0
    %1170 = vmatprep.subr.bf16.mxu0 %v1096
    %1171 = vmatpush1.bf16.msra.mxu0 %v1095
    %1172 = vmatprep.subr.bf16.mxu0 %v1092
    %1173 = vmatpush1.bf16.msra.mxu0 %v1091
    %1174 = vmatprep.subr.bf16.mxu0 %v1088
    %1175 = vmatpush1.bf16.msra.mxu0 %v1087
    %1176 = vmatprep.subr.bf16.mxu0 %v1084
    %1177 = vmatpush1.bf16.msra.mxu0 %v1083
    %1178 = vmatprep.subr.bf16.mxu0 %v1080
    %1179 = vmatpush1.bf16.msra.mxu0 %v1079
    %1180 = vmatprep.subr.bf16.mxu0 %v1076
    %1181 = vmatpush1.bf16.msra.mxu0 %v1075
    %1182 = vmatprep.subr.bf16.mxu0 %v1072
    %1183 = vmatpush1.bf16.msra.mxu0 %v1071
    %1184 = vmatprep.subr.bf16.mxu0 %v1068
    %1185 = vmatpush1.bf16.msra.mxu0 %v1067
    %1186 = vmatprep.subr.bf16.mxu0 0
    %1187 = vmatpush2.bf16.msra.mxu0 0
    %1188 = vmatprep.subr.bf16.mxu0 0
    %1189 = vmatpush2.bf16.msra.mxu0 0
    %1190 = vmatprep.subr.bf16.mxu0 0
    %1191 = vmatpush2.bf16.msra.mxu0 0
    %1192 = vmatprep.subr.bf16.mxu0 0
    %1193 = vmatpush2.bf16.msra.mxu0 0
    %1194 = vmatprep.subr.bf16.mxu0 0
    %1195 = vmatpush2.bf16.msra.mxu0 0
    %1196 = vmatprep.subr.bf16.mxu0 0
    %1197 = vmatpush2.bf16.msra.mxu0 0
    %1198 = vmatprep.subr.bf16.mxu0 0
    %1199 = vmatpush2.bf16.msra.mxu0 0
    %1200 = vmatprep.subr.bf16.mxu0 0
    %1201 = vmatpush2.bf16.msra.mxu0 0
    %1202 = vmatprep.mubr.bf16.mxu0 0
    %1203 = vmatmul.mubr.bf16.gmra.mxu0 %v936
    %v1204 = vpop.f32.mrf.mxu0
    %v1205 = vadd.f32 0.0, %v1204
    %v1206 = vpop.f32.mrf.mxu0
    %v1207 = vadd.f32 0.0, %v1206
    %v1208 = vpop.f32.mrf.mxu0
    %v1209 = vpop.f32.mrf.mxu0
    %1210 = vdwg.mxu0
    %v1211 = vmax.f32 %v1164, 0.0
    %v1212 = vmax.f32 %v1166, 0.0
    %v1213 = vmax.f32 %v1205, 0.0
    %v1214 = vmax.f32 %v1207, 0.0
    %v1215 = vpack.c.bf16 %v1211, %v1211
    %v1216 = vpack.c.bf16 %v1212, %v1212
    %v1217 = vpack.c.bf16 %v1213, %v1213
    %v1218 = vpack.c.bf16 %v1214, %v1214
    %v1219 = vld [vmem:[#allocation7] sm:$0xf]
    %v1220 = vld [vmem:[#allocation7 + $0x4] sm:$0xf]
    %v1221 = vld [vmem:[#allocation7 + $0x8] sm:$0xf]
    %v1222 = vld [vmem:[#allocation7 + $0xc] sm:$0xf]
    %v1223 = vld [vmem:[#allocation7 + $0x10] sm:$0xf]
    %v1224 = vld [vmem:[#allocation7 + $0x14] sm:$0xf]
    %v1225 = vld [vmem:[#allocation7 + $0x18] sm:$0xf]
    %v1226 = vld [vmem:[#allocation7 + $0x1c] sm:$0xf]
    %v1227 = vld [vmem:[#allocation7 + $0x20] sm:$0xf]
    %v1228 = vld [vmem:[#allocation7 + $0x24] sm:$0xf]
    %v1229 = vld [vmem:[#allocation7 + $0x28] sm:$0xf]
    %v1230 = vld [vmem:[#allocation7 + $0x2c] sm:$0xf]
    %v1231 = vld [vmem:[#allocation7 + $0x30] sm:$0xf]
    %v1232 = vld [vmem:[#allocation7 + $0x34] sm:$0xf]
    %v1233 = vld [vmem:[#allocation7 + $0x38] sm:$0xf]
    %v1234 = vld [vmem:[#allocation7 + $0x3c] sm:$0xf]
    %v1235 = vld [vmem:[#allocation7 + $0x40] sm:$0xf]
    %v1236 = vld [vmem:[#allocation7 + $0x44] sm:$0xf]
    %v1237 = vld [vmem:[#allocation7 + $0x48] sm:$0xf]
    %v1238 = vld [vmem:[#allocation7 + $0x4c] sm:$0xf]
    %v1239 = vld [vmem:[#allocation7 + $0x50] sm:$0xf]
    %v1240 = vld [vmem:[#allocation7 + $0x54] sm:$0xf]
    %v1241 = vld [vmem:[#allocation7 + $0x58] sm:$0xf]
    %v1242 = vld [vmem:[#allocation7 + $0x5c] sm:$0xf]
    %v1243 = vld [vmem:[#allocation7 + $0x60] sm:$0xf]
    %v1244 = vld [vmem:[#allocation7 + $0x64] sm:$0xf]
    %v1245 = vld [vmem:[#allocation7 + $0x68] sm:$0xf]
    %v1246 = vld [vmem:[#allocation7 + $0x6c] sm:$0xf]
    %v1247 = vld [vmem:[#allocation7 + $0x70] sm:$0xf]
    %v1248 = vld [vmem:[#allocation7 + $0x74] sm:$0xf]
    %v1249 = vld [vmem:[#allocation7 + $0x78] sm:$0xf]
    %v1250 = vld [vmem:[#allocation7 + $0x7c] sm:$0xf]
    %v1251 = vld [vmem:[#allocation7 + $0x80] sm:$0xf]
    %v1252 = vld [vmem:[#allocation7 + $0x84] sm:$0xf]
    %v1253 = vld [vmem:[#allocation7 + $0x88] sm:$0xf]
    %v1254 = vld [vmem:[#allocation7 + $0x8c] sm:$0xf]
    %v1255 = vld [vmem:[#allocation7 + $0x90] sm:$0xf]
    %v1256 = vld [vmem:[#allocation7 + $0x94] sm:$0xf]
    %v1257 = vld [vmem:[#allocation7 + $0x98] sm:$0xf]
    %v1258 = vld [vmem:[#allocation7 + $0x9c] sm:$0xf]
    %v1259 = vld [vmem:[#allocation7 + $0xa0] sm:$0xf]
    %v1260 = vld [vmem:[#allocation7 + $0xa4] sm:$0xf]
    %v1261 = vld [vmem:[#allocation7 + $0xa8] sm:$0xf]
    %v1262 = vld [vmem:[#allocation7 + $0xac] sm:$0xf]
    %v1263 = vld [vmem:[#allocation7 + $0xb0] sm:$0xf]
    %v1264 = vld [vmem:[#allocation7 + $0xb4] sm:$0xf]
    %v1265 = vld [vmem:[#allocation7 + $0xb8] sm:$0xf]
    %v1266 = vld [vmem:[#allocation7 + $0xbc] sm:$0xf]
    %v1267 = vld [vmem:[#allocation7 + $0xc0] sm:$0xf]
    %v1268 = vld [vmem:[#allocation7 + $0xc4] sm:$0xf]
    %v1269 = vld [vmem:[#allocation7 + $0xc8] sm:$0xf]
    %v1270 = vld [vmem:[#allocation7 + $0xcc] sm:$0xf]
    %v1271 = vld [vmem:[#allocation7 + $0xd0] sm:$0xf]
    %v1272 = vld [vmem:[#allocation7 + $0xd4] sm:$0xf]
    %v1273 = vld [vmem:[#allocation7 + $0xd8] sm:$0xf]
    %v1274 = vld [vmem:[#allocation7 + $0xdc] sm:$0xf]
    %v1275 = vld [vmem:[#allocation7 + $0xe0] sm:$0xf]
    %v1276 = vld [vmem:[#allocation7 + $0xe4] sm:$0xf]
    %v1277 = vld [vmem:[#allocation7 + $0xe8] sm:$0xf]
    %v1278 = vld [vmem:[#allocation7 + $0xec] sm:$0xf]
    %v1279 = vld [vmem:[#allocation7 + $0xf0] sm:$0xf]
    %v1280 = vld [vmem:[#allocation7 + $0xf4] sm:$0xf]
    %v1281 = vld [vmem:[#allocation7 + $0xf8] sm:$0xf]
    %v1282 = vld [vmem:[#allocation7 + $0xfc] sm:$0xf]
    %v1283 = vld [vmem:[%s10] sm:$0x1]
    %v1285 = vlaneseq
    %v1286 = vshrl.u32 %v1285, 7
    %v1287 = vsub.s32 0, %v1286
    %v1288 = vrot.slane %v1283, %v1287
    %v1354 = vunpack.c.l.b16 %v1219
    %v1355 = vunpack.c.l.b16 %v1220
    %v1356 = vunpack.c.l.b16 %v1221
    %v1357 = vunpack.c.l.b16 %v1222
    %v1358 = vunpack.c.l.b16 %v1223
    %v1359 = vunpack.c.l.b16 %v1224
    %v1360 = vunpack.c.l.b16 %v1225
    %v1361 = vunpack.c.l.b16 %v1226
    %v1362 = vunpack.c.l.b16 %v1227
    %v1363 = vunpack.c.l.b16 %v1228
    %v1364 = vunpack.c.l.b16 %v1229
    %v1365 = vunpack.c.l.b16 %v1230
    %v1366 = vunpack.c.l.b16 %v1231
    %v1367 = vunpack.c.l.b16 %v1232
    %v1368 = vunpack.c.l.b16 %v1233
    %v1369 = vunpack.c.l.b16 %v1234
    %v1370 = vunpack.c.l.b16 %v1235
    %v1371 = vunpack.c.l.b16 %v1236
    %v1372 = vunpack.c.l.b16 %v1237
    %v1373 = vunpack.c.l.b16 %v1238
    %v1374 = vunpack.c.l.b16 %v1239
    %v1375 = vunpack.c.l.b16 %v1240
    %v1376 = vunpack.c.l.b16 %v1241
    %v1377 = vunpack.c.l.b16 %v1242
    %v1378 = vunpack.c.l.b16 %v1243
    %v1379 = vunpack.c.l.b16 %v1244
    %v1380 = vunpack.c.l.b16 %v1245
    %v1381 = vunpack.c.l.b16 %v1246
    %v1382 = vunpack.c.l.b16 %v1247
    %v1383 = vunpack.c.l.b16 %v1248
    %v1384 = vunpack.c.l.b16 %v1249
    %v1385 = vunpack.c.l.b16 %v1250
    %v1386 = vunpack.c.l.b16 %v1251
    %v1387 = vunpack.c.l.b16 %v1252
    %v1388 = vunpack.c.l.b16 %v1253
    %v1389 = vunpack.c.l.b16 %v1254
    %v1390 = vunpack.c.l.b16 %v1255
    %v1391 = vunpack.c.l.b16 %v1256
    %v1392 = vunpack.c.l.b16 %v1257
    %v1393 = vunpack.c.l.b16 %v1258
    %v1394 = vunpack.c.l.b16 %v1259
    %v1395 = vunpack.c.l.b16 %v1260
    %v1396 = vunpack.c.l.b16 %v1261
    %v1397 = vunpack.c.l.b16 %v1262
    %v1398 = vunpack.c.l.b16 %v1263
    %v1399 = vunpack.c.l.b16 %v1264
    %v1400 = vunpack.c.l.b16 %v1265
    %v1401 = vunpack.c.l.b16 %v1266
    %v1402 = vunpack.c.l.b16 %v1267
    %v1403 = vunpack.c.l.b16 %v1268
    %v1404 = vunpack.c.l.b16 %v1269
    %v1405 = vunpack.c.l.b16 %v1270
    %v1406 = vunpack.c.l.b16 %v1271
    %v1407 = vunpack.c.l.b16 %v1272
    %v1408 = vunpack.c.l.b16 %v1273
    %v1409 = vunpack.c.l.b16 %v1274
    %v1410 = vunpack.c.l.b16 %v1275
    %v1411 = vunpack.c.l.b16 %v1276
    %v1412 = vunpack.c.l.b16 %v1277
    %v1413 = vunpack.c.l.b16 %v1278
    %v1414 = vunpack.c.l.b16 %v1279
    %v1415 = vunpack.c.l.b16 %v1280
    %v1416 = vunpack.c.l.b16 %v1281
    %v1417 = vunpack.c.l.b16 %v1282
    %v1418 = vpack.c.b16 %v1355, %v1354
    %v1419 = vpack.c.b16 %v1357, %v1356
    %v1420 = vpack.c.b16 %v1359, %v1358
    %v1421 = vpack.c.b16 %v1361, %v1360
    %v1422 = vpack.c.b16 %v1363, %v1362
    %v1423 = vpack.c.b16 %v1365, %v1364
    %v1424 = vpack.c.b16 %v1367, %v1366
    %v1425 = vpack.c.b16 %v1369, %v1368
    %v1426 = vpack.c.b16 %v1371, %v1370
    %v1427 = vpack.c.b16 %v1373, %v1372
    %v1428 = vpack.c.b16 %v1375, %v1374
    %v1429 = vpack.c.b16 %v1377, %v1376
    %v1430 = vpack.c.b16 %v1379, %v1378
    %v1431 = vpack.c.b16 %v1381, %v1380
    %v1432 = vpack.c.b16 %v1383, %v1382
    %v1433 = vpack.c.b16 %v1385, %v1384
    %v1434 = vpack.c.b16 %v1387, %v1386
    %v1435 = vpack.c.b16 %v1389, %v1388
    %v1436 = vpack.c.b16 %v1391, %v1390
    %v1437 = vpack.c.b16 %v1393, %v1392
    %v1438 = vpack.c.b16 %v1395, %v1394
    %v1439 = vpack.c.b16 %v1397, %v1396
    %v1440 = vpack.c.b16 %v1399, %v1398
    %v1441 = vpack.c.b16 %v1401, %v1400
    %v1442 = vpack.c.b16 %v1403, %v1402
    %v1443 = vpack.c.b16 %v1405, %v1404
    %v1444 = vpack.c.b16 %v1407, %v1406
    %v1445 = vpack.c.b16 %v1409, %v1408
    %v1446 = vpack.c.b16 %v1411, %v1410
    %v1447 = vpack.c.b16 %v1413, %v1412
    %v1448 = vpack.c.b16 %v1415, %v1414
    %v1449 = vpack.c.b16 %v1417, %v1416
    %1482 = vmatprep.subr.bf16.mxu0 0
    %1483 = vmatpush1.bf16.msra.mxu0 %v1425
    %1484 = vmatprep.subr.bf16.mxu0 0
    %1485 = vmatpush1.bf16.msra.mxu0 %v1424
    %1486 = vmatprep.subr.bf16.mxu0 0
    %1487 = vmatpush1.bf16.msra.mxu0 %v1423
    %1488 = vmatprep.subr.bf16.mxu0 0
    %1489 = vmatpush1.bf16.msra.mxu0 %v1422
    %1490 = vmatprep.subr.bf16.mxu0 0
    %1491 = vmatpush1.bf16.msra.mxu0 %v1421
    %1492 = vmatprep.subr.bf16.mxu0 0
    %1493 = vmatpush1.bf16.msra.mxu0 %v1420
    %1494 = vmatprep.subr.bf16.mxu0 0
    %1495 = vmatpush1.bf16.msra.mxu0 %v1419
    %1496 = vmatprep.subr.bf16.mxu0 0
    %1497 = vmatpush1.bf16.msra.mxu0 %v1418
    %1498 = vmatprep.subr.bf16.mxu0 0
    %1499 = vmatpush2.bf16.msra.mxu0 %v1433
    %1500 = vmatprep.subr.bf16.mxu0 0
    %1501 = vmatpush2.bf16.msra.mxu0 %v1432
    %1502 = vmatprep.subr.bf16.mxu0 0
    %1503 = vmatpush2.bf16.msra.mxu0 %v1431
    %1504 = vmatprep.subr.bf16.mxu0 0
    %1505 = vmatpush2.bf16.msra.mxu0 %v1430
    %1506 = vmatprep.subr.bf16.mxu0 0
    %1507 = vmatpush2.bf16.msra.mxu0 %v1429
    %1508 = vmatprep.subr.bf16.mxu0 0
    %1509 = vmatpush2.bf16.msra.mxu0 %v1428
    %1510 = vmatprep.subr.bf16.mxu0 0
    %1511 = vmatpush2.bf16.msra.mxu0 %v1427
    %1512 = vmatprep.subr.bf16.mxu0 0
    %1513 = vmatpush2.bf16.msra.mxu0 %v1426
    %1514 = vmatprep.mubr.bf16.mxu0 %v1216
    %1515 = vmatmul.mubr.bf16.gmra.mxu0 %v1215
    %v1516 = vpop.f32.mrf.mxu0
    %v1517 = vadd.f32 %v1288, %v1516
    %v1518 = vpop.f32.mrf.mxu0
    %v1519 = vpop.f32.mrf.mxu0
    %v1520 = vpop.f32.mrf.mxu0
    %1521 = vdwg.mxu0
    %1522 = vmatprep.subr.bf16.mxu0 0
    %1523 = vmatpush1.bf16.msra.mxu0 %v1441
    %1524 = vmatprep.subr.bf16.mxu0 0
    %1525 = vmatpush1.bf16.msra.mxu0 %v1440
    %1526 = vmatprep.subr.bf16.mxu0 0
    %1527 = vmatpush1.bf16.msra.mxu0 %v1439
    %1528 = vmatprep.subr.bf16.mxu0 0
    %1529 = vmatpush1.bf16.msra.mxu0 %v1438
    %1530 = vmatprep.subr.bf16.mxu0 0
    %1531 = vmatpush1.bf16.msra.mxu0 %v1437
    %1532 = vmatprep.subr.bf16.mxu0 0
    %1533 = vmatpush1.bf16.msra.mxu0 %v1436
    %1534 = vmatprep.subr.bf16.mxu0 0
    %1535 = vmatpush1.bf16.msra.mxu0 %v1435
    %1536 = vmatprep.subr.bf16.mxu0 0
    %1537 = vmatpush1.bf16.msra.mxu0 %v1434
    %1538 = vmatprep.subr.bf16.mxu0 0
    %1539 = vmatpush2.bf16.msra.mxu0 %v1449
    %1540 = vmatprep.subr.bf16.mxu0 0
    %1541 = vmatpush2.bf16.msra.mxu0 %v1448
    %1542 = vmatprep.subr.bf16.mxu0 0
    %1543 = vmatpush2.bf16.msra.mxu0 %v1447
    %1544 = vmatprep.subr.bf16.mxu0 0
    %1545 = vmatpush2.bf16.msra.mxu0 %v1446
    %1546 = vmatprep.subr.bf16.mxu0 0
    %1547 = vmatpush2.bf16.msra.mxu0 %v1445
    %1548 = vmatprep.subr.bf16.mxu0 0
    %1549 = vmatpush2.bf16.msra.mxu0 %v1444
    %1550 = vmatprep.subr.bf16.mxu0 0
    %1551 = vmatpush2.bf16.msra.mxu0 %v1443
    %1552 = vmatprep.subr.bf16.mxu0 0
    %1553 = vmatpush2.bf16.msra.mxu0 %v1442
    %1554 = vmatprep.mubr.bf16.mxu0 %v1218
    %1555 = vmatmul.mubr.bf16.gmra.mxu0 %v1217
    %v1556 = vpop.f32.mrf.mxu0
    %v1557 = vadd.f32 %v1517, %v1556
    %v1558 = vpop.f32.mrf.mxu0
    %v1559 = vpop.f32.mrf.mxu0
    %v1560 = vpop.f32.mrf.mxu0
    %1561 = vdwg.mxu0
    %1562 = vst [vmem:[#allocation8] sm:$0xff] %v1557
    %s1563 = smul.u32 0, 8
    %v1564 = vlaneseq
    %v1565 = vshrl.u32 %v1564, 7
    %v1566 = vstv %s1563
    %v1567 = vadd.s32 %v1566, %v1565
    %vm1568 = vcmp.lt.s32.totalorder %v1567, 8
    %v1569 = vsel %vm1568, 1, 0
    %v1570 = vcvt.s32.f32 %v1569
    %v1571 = vsub.f32 %v1557, %v85
    %v1572 = vmul.f32 %v1571, %v1571
    %v1573 = vmul.f32 %v1570, %v1572
    %1574 = vadd.xlane.f32.xlu0 %v1573
    %v1575 = vpop.xlane.xlu0 %1574
    %v1576 = vrot.slane %v1575, 4
    %v1577 = vadd.f32 %v1575, %v1576
    %v1578 = vrot.slane %v1577, 2
    %v1579 = vadd.f32 %v1577, %v1578
    %v1580 = vrot.slane %v1579, 1
    %v1581 = vadd.f32 %v1579, %v1580
    %s1582 = vtos %v1581
    %v1583 = vsub.f32 %v932, %v729
    %v1584 = vmul.f32 %v1583, %v1583
    %v1585 = vmul.f32 %v1570, %v1584
    %v1586 = vsel %vm735, %v1585, 0.0
    %1587 = vadd.xlane.f32.xlu0 %v1586
    %v1588 = vpop.xlane.xlu0 %1587
    %v1589 = vrot.slane %v1588, 4
    %v1590 = vadd.f32 %v1588, %v1589
    %v1591 = vrot.slane %v1590, 2
    %v1592 = vadd.f32 %v1590, %v1591
    %v1593 = vrot.slane %v1592, 1
    %v1594 = vadd.f32 %v1592, %v1593
    %s1595 = vtos %v1594
    %vm1596 = vcmp.eq.s32.totalorder %v1565, 0
    %vm1597 = vcmp.eq.s32.totalorder %v827, 0
    %vm1598 = vmand %vm1596, %vm1597
    %vm1599 = vcmp.eq.s32.totalorder %v827, 1
    %vm1600 = vmand %vm1596, %vm1599
    %v1601 = vstv %s1595
    %v1602 = vsel %vm1600, %v1601, 0.0
    %v1603 = vstv %s1582
    %v1604 = vsel %vm1598, %v1603, %v1602
    %1605 = vst [vmem:[#allocation11] sm:$0xff] %v1604
    // Predicated region
    $region58: #{tpu_custom_call.1} parent=1 // pred_check
      _
    $region59: #{tpu_custom_call.1} parent=1 // pred_check_branch
      %1607 = sbr.rel (0) target = $region61
    $region60: #{tpu_custom_call.1} parent=1 // pred_region
      %s1609 = ssub.s32 128, 128
      %1610 = vsyncadd [#allocation4], %s1609
      %s1612 = sshll.u32 [#allocation8], 4
      %s1613 = int_to_ptr.vmem [resolvable:$true] %s1612
      %1615 = dma.vmem_to_hbm [thread:$0]  %s1613, 128, %s11, [#allocation4]
    $region61: #{tpu_custom_call.1} parent=1 // pred_fallthru
      _
    // Predicated region
    $region62: #{tpu_custom_call.1} parent=1 // pred_check
      _
    $region63: #{tpu_custom_call.1} parent=1 // pred_check_branch
      %1617 = sbr.rel (0) target = $region65
    $region64: #{tpu_custom_call.1} parent=1 // pred_region
      %s1619 = ssub.s32 128, 128
      %1620 = vsyncadd [#allocation10], %s1619
      %s1622 = sshll.u32 [#allocation9], 4
      %s1623 = int_to_ptr.vmem [resolvable:$true] %s1622
      %1625 = dma.vmem_to_hbm [thread:$0]  %s1623, 128, %s12, [#allocation10]
    $region65: #{tpu_custom_call.1} parent=1 // pred_fallthru
      _
    // Predicated region
    $region66: #{tpu_custom_call.1} parent=1 // pred_check
      _
    $region67: #{tpu_custom_call.1} parent=1 // pred_check_branch
      %1627 = sbr.rel (0) target = $region69
    $region68: #{tpu_custom_call.1} parent=1 // pred_region
      %s1629 = ssub.s32 128, 128
      %1630 = vsyncadd [#allocation10], %s1629
      %s1632 = sshll.u32 [#allocation11], 4
      %s1633 = int_to_ptr.vmem [resolvable:$true] %s1632
      %1635 = dma.vmem_to_hbm [thread:$0]  %s1633, 128, %s13, [#allocation10]
    $region69: #{tpu_custom_call.1} parent=1 // pred_fallthru
      _
    // Predicated region
    $region70: #{tpu_custom_call.1} parent=1 // pred_check
      _
    $region71: #{tpu_custom_call.1} parent=1 // pred_check_branch
      %1637 = sbr.rel (0) target = $region73
    $region72: #{tpu_custom_call.1} parent=1 // pred_region
      %1638 = dma.done [#allocation4], 128
    $region73: #{tpu_custom_call.1} parent=1 // pred_fallthru
      _
    // Predicated region
    $region74: #{tpu_custom_call.1} parent=1 // pred_check
      _
    $region75: #{tpu_custom_call.1} parent=1 // pred_check_branch
      %1640 = sbr.rel (0) target = $region77
    $region76: #{tpu_custom_call.1} parent=1 // pred_region
      %1641 = dma.done [#allocation10], 128
    $region77: #{tpu_custom_call.1} parent=1 // pred_fallthru
      _
    // Predicated region
    $region78: #{tpu_custom_call.1} parent=1 // pred_check
      _
    $region79: #{tpu_custom_call.1} parent=1 // pred_check_branch
      %1643 = sbr.rel (0) target = $region81
    $region80: #{tpu_custom_call.1} parent=1 // pred_region
      %1644 = dma.done [#allocation10], 128
    $region81: #{tpu_custom_call.1} parent=1 // pred_fallthru
      _
    %1645 = vsyncpa [#allocation3], 1
    %1646 = vsyncpa [#allocation6], 1
    %1647 = vsyncpa [#allocation4], 1
    %1648 = vsyncpa [#allocation10], 1

</llo_original>
